<compile_context>
chip_gen: v6e
topology: v6e:2x2x1
jax: 0.10.0
libtpu: 0.0.40
codegen_flags: <defaults>
</compile_context>

<pallas_src>
import jax
import jax.numpy as jnp
from jax.experimental import pallas as pl
from jax.experimental.pallas import tpu as pltpu


def decoder_kernel(z_ref, w1_ref, b1_ref, w2_ref, b2_ref, out_ref):
    # z_ref:  (TB, Z) f32     w1_ref: (Z, H) bf16   b1_ref: (1, H) f32
    # w2_ref: (H, O) bf16     b2_ref: (1, O) f32    out_ref: (TB, O) f32
    z = z_ref[...].astype(jnp.bfloat16)

    # First linear + ReLU (MXU bf16 matmul, f32 accumulate).
    h = jnp.dot(z, w1_ref[...], preferred_element_type=jnp.float32) + b1_ref[...]
    h = jnp.maximum(h, 0.0)

    # Second linear + sigmoid.
    o = (
        jnp.dot(h.astype(jnp.bfloat16), w2_ref[...], preferred_element_type=jnp.float32)
        + b2_ref[...]
    )
    out_ref[...] = jax.nn.sigmoid(o).astype(out_ref.dtype)


def decoder_forward(z, w1, b1, w2, b2):
    """z: [B, z_dim] f32; w1/w2: bf16 [in,out]; b1/b2: f32 [1,out] -> [B, 784] f32."""
    B, Z = z.shape
    H = w1.shape[1]
    O = w2.shape[1]

    # Batch tile: small batches run in one step; large batches tile at 256
    # rows (fills the 2x256^2 MXU on v6e/v7x; fine on v5e too).
    TB = B if B <= 256 else 256
    grid = (pl.cdiv(B, TB),)

    cost = pl.CostEstimate(
        flops=2 * B * (Z * H + H * O),
        transcendentals=B * O,  # sigmoid
        bytes_accessed=(
            z.size * 4 + w1.size * 2 + w2.size * 2 + b1.size * 4 + b2.size * 4 + B * O * 4
        ),
    )

    return pl.pallas_call(
        decoder_kernel,
        out_shape=jax.ShapeDtypeStruct((B, O), jnp.float32),
        grid=grid,
        in_specs=[
            pl.BlockSpec((TB, Z), lambda i: (i, 0)),   # z: tiled over batch
            pl.BlockSpec((Z, H), lambda i: (0, 0)),    # w1: resident across steps
            pl.BlockSpec((1, H), lambda i: (0, 0)),    # b1
            pl.BlockSpec((H, O), lambda i: (0, 0)),    # w2: resident across steps
            pl.BlockSpec((1, O), lambda i: (0, 0)),    # b2
        ],
        out_specs=pl.BlockSpec((TB, O), lambda i: (i, 0)),
        compiler_params=pltpu.CompilerParams(
            dimension_semantics=("parallel",),
        ),
        cost_estimate=cost,
    )(z, w1, b1, w2, b2)


def init_params(key, z_dim=20, hidden_dim=500, out_dim=784):
    """Deterministic PyTorch-style init: U(-1/sqrt(fan_in), 1/sqrt(fan_in)).

    Weights are returned in bf16 (HBM-traffic optimization); biases stay f32.
    """
    k1, k2, k3, k4 = jax.random.split(key, 4)
    bound1 = 1.0 / jnp.sqrt(z_dim)
    bound2 = 1.0 / jnp.sqrt(hidden_dim)
    w1 = jax.random.uniform(k1, (z_dim, hidden_dim), jnp.float32, -bound1, bound1)
    b1 = jax.random.uniform(k2, (1, hidden_dim), jnp.float32, -bound1, bound1)
    w2 = jax.random.uniform(k3, (hidden_dim, out_dim), jnp.float32, -bound2, bound2)
    b2 = jax.random.uniform(k4, (1, out_dim), jnp.float32, -bound2, bound2)
    return w1.astype(jnp.bfloat16), b1, w2.astype(jnp.bfloat16), b2


def reference_forward(z, w1_bf16, b1, w2_bf16, b2):
    """Pure-JAX reference mirroring the kernel's bf16-weight numerics."""
    w1 = w1_bf16.astype(jnp.float32)
    w2 = w2_bf16.astype(jnp.float32)
    z_bf = z.astype(jnp.bfloat16).astype(jnp.float32)
    h = jnp.maximum(z_bf @ w1 + b1, 0.0)
    h_bf = h.astype(jnp.bfloat16).astype(jnp.float32)
    return jax.nn.sigmoid(h_bf @ w2 + b2)


if __name__ == "__main__":
    key = jax.random.PRNGKey(0)
    k_params, k_z = jax.random.split(key)

    z_dim, hidden_dim, out_dim = 20, 500, 784
    batch = 8

    w1, b1, w2, b2 = init_params(k_params, z_dim, hidden_dim, out_dim)
    z = jax.random.normal(k_z, (batch, z_dim), jnp.float32)

    mean = decoder_forward(z, w1, b1, w2, b2)
    mean = jax.block_until_ready(mean)

    # Sanity check against a pure-JAX reference with matching bf16-weight numerics.
    ref = reference_forward(z, w1, b1, w2, b2)
    assert mean.shape == (batch, out_dim)
    assert jnp.all(jnp.isfinite(mean))
    assert jnp.allclose(mean, ref, atol=2e-3, rtol=2e-3)

    print("KERNEL_OK")
</pallas_src>

<mosaic_0001>
module attributes {stable_mosaic.version = 11 : i64} {
  func.func @decoder_kernel(%arg0: i32, %arg1: memref<8x20xf32, #tpu.memory_space<vmem>>, %arg2: memref<20x500xbf16, #tpu.memory_space<vmem>>, %arg3: memref<1x500xf32, #tpu.memory_space<vmem>>, %arg4: memref<500x784xbf16, #tpu.memory_space<vmem>>, %arg5: memref<1x784xf32, #tpu.memory_space<vmem>>, %arg6: memref<8x784xf32, #tpu.memory_space<vmem>>) attributes {dimension_semantics = [#tpu.dimension_semantics<parallel>], iteration_bounds = array<i64: 1>, scalar_prefetch = 0 : i64, scratch_operands = 0 : i64, tpu.core_type = #tpu.core_type<tc>, window_params = [{transform_indices = @transform_0, window_bounds = array<i64: 8, 20>}, {pipeline_mode = #tpu.pipeline_mode<synchronous>, transform_indices = @transform_1, window_bounds = array<i64: 20, 500>}, {pipeline_mode = #tpu.pipeline_mode<synchronous>, transform_indices = @transform_2, window_bounds = array<i64: 1, 500>}, {pipeline_mode = #tpu.pipeline_mode<synchronous>, transform_indices = @transform_3, window_bounds = array<i64: 500, 784>}, {pipeline_mode = #tpu.pipeline_mode<synchronous>, transform_indices = @transform_4, window_bounds = array<i64: 1, 784>}, {transform_indices = @transform_5, window_bounds = array<i64: 8, 784>}]} {
    %c0 = arith.constant 0 : index
    %c0_0 = arith.constant 0 : index
    %0 = vector.load %arg1[%c0, %c0_0] : memref<8x20xf32, #tpu.memory_space<vmem>>, vector<8x20xf32>
    %1 = arith.truncf %0 : vector<8x20xf32> to vector<8x20xbf16>
    %c0_1 = arith.constant 0 : index
    %c0_2 = arith.constant 0 : index
    %2 = vector.load %arg2[%c0_1, %c0_2] : memref<20x500xbf16, #tpu.memory_space<vmem>>, vector<20x500xbf16>
    %cst = arith.constant dense<0.000000e+00> : vector<8x500xf32>
    %3 = tpu.matmul %1, %2, %cst {dimension_numbers = #tpu.dot_dimension_numbers<[1], [0], [0], [1], [0, 0, 1, 1], [], []>} : vector<8x20xbf16>, vector<20x500xbf16>, vector<8x500xf32> -> vector<8x500xf32>
    %c0_3 = arith.constant 0 : index
    %c0_4 = arith.constant 0 : index
    %4 = vector.load %arg3[%c0_3, %c0_4] : memref<1x500xf32, #tpu.memory_space<vmem>>, vector<1x500xf32>
    %5 = vector.broadcast %4 : vector<1x500xf32> to vector<8x500xf32>
    %6 = arith.addf %3, %5 : vector<8x500xf32>
    %cst_5 = arith.constant 0.000000e+00 : f32
    %7 = vector.broadcast %cst_5 : f32 to vector<8x500xf32>
    %8 = arith.maximumf %6, %7 : vector<8x500xf32>
    %9 = arith.truncf %8 : vector<8x500xf32> to vector<8x500xbf16>
    %c0_6 = arith.constant 0 : index
    %c0_7 = arith.constant 0 : index
    %10 = vector.load %arg4[%c0_6, %c0_7] : memref<500x784xbf16, #tpu.memory_space<vmem>>, vector<500x784xbf16>
    %cst_8 = arith.constant dense<0.000000e+00> : vector<8x784xf32>
    %11 = tpu.matmul %9, %10, %cst_8 {dimension_numbers = #tpu.dot_dimension_numbers<[1], [0], [0], [1], [0, 0, 1, 1], [], []>} : vector<8x500xbf16>, vector<500x784xbf16>, vector<8x784xf32> -> vector<8x784xf32>
    %c0_9 = arith.constant 0 : index
    %c0_10 = arith.constant 0 : index
    %12 = vector.load %arg5[%c0_9, %c0_10] : memref<1x784xf32, #tpu.memory_space<vmem>>, vector<1x784xf32>
    %13 = vector.broadcast %12 : vector<1x784xf32> to vector<8x784xf32>
    %14 = arith.addf %11, %13 : vector<8x784xf32>
    %15 = arith.negf %14 : vector<8x784xf32>
    %16 = math.exp %15 : vector<8x784xf32>
    %cst_11 = arith.constant 1.000000e+00 : f32
    %17 = vector.broadcast %cst_11 : f32 to vector<8x784xf32>
    %18 = arith.addf %17, %16 : vector<8x784xf32>
    %19 = arith.divf %17, %18 : vector<8x784xf32>
    %c0_12 = arith.constant 0 : index
    %c0_13 = arith.constant 0 : index
    %20 = vector.load %arg6[%c0_12, %c0_13] : memref<8x784xf32, #tpu.memory_space<vmem>>, vector<8x784xf32>
    tpu.vector_store %arg6[%c0_12, %c0_13], %19 {strides = array<i32>} : memref<8x784xf32, #tpu.memory_space<vmem>>, vector<8x784xf32>,
    return
  }
  func.func @transform_0(%arg0: i32) -> (i32, i32) {
    %c0_i32 = arith.constant 0 : i32
    %c0_i32_0 = arith.constant 0 : i32
    return %arg0, %c0_i32 : i32, i32
  }
  func.func @transform_1(%arg0: i32) -> (i32, i32) {
    %c0_i32 = arith.constant 0 : i32
    %c0_i32_0 = arith.constant 0 : i32
    %c0_i32_1 = arith.constant 0 : i32
    return %c0_i32, %c0_i32_0 : i32, i32
  }
  func.func @transform_2(%arg0: i32) -> (i32, i32) {
    %c0_i32 = arith.constant 0 : i32
    %c0_i32_0 = arith.constant 0 : i32
    %c0_i32_1 = arith.constant 0 : i32
    return %c0_i32, %c0_i32_0 : i32, i32
  }
  func.func @transform_3(%arg0: i32) -> (i32, i32) {
    %c0_i32 = arith.constant 0 : i32
    %c0_i32_0 = arith.constant 0 : i32
    %c0_i32_1 = arith.constant 0 : i32
    return %c0_i32, %c0_i32_0 : i32, i32
  }
  func.func @transform_4(%arg0: i32) -> (i32, i32) {
    %c0_i32 = arith.constant 0 : i32
    %c0_i32_0 = arith.constant 0 : i32
    %c0_i32_1 = arith.constant 0 : i32
    return %c0_i32, %c0_i32_0 : i32, i32
  }
  func.func @transform_5(%arg0: i32) -> (i32, i32) {
    %c0_i32 = arith.constant 0 : i32
    %c0_i32_0 = arith.constant 0 : i32
    return %arg0, %c0_i32 : i32, i32
  }
}

</mosaic_0001>

<llo_original>
// kernel: tpu_custom_call.1
$region0: #{tpu_custom_call.1}
  #allocation0 [shape = 'u32[]', space=smem, size = 0x4, offset = 0x4, fixed_abs, tag = 'smem constant byte address 0x4 - core index']
  #allocation1 [shape = 'u32[144,128]{1,0:T(1,128)}', space=vmem, size = 0x12000, scoped, tag = 'internal scratch']
  %s0 = inlined_call_operand.vmem [shape: f32[8,20], index: 0, kind: input, shape index: {}]
  %s1 = inlined_call_operand.vmem [shape: bf16[20,500], index: 1, kind: input, shape index: {}]
  %s2 = inlined_call_operand.vmem [shape: f32[1,500], index: 2, kind: input, shape index: {}]
  %s3 = inlined_call_operand.vmem [shape: bf16[500,784], index: 3, kind: input, shape index: {}]
  %s4 = inlined_call_operand.vmem [shape: f32[1,784], index: 4, kind: input, shape index: {}]
  %s5 = inlined_call_operand.hbm [shape: f32[8,784], index: 5, kind: output, shape index: {}]
  %s6 = sld [smem:[#allocation0]]
  $region30: #{tpu_custom_call.1} parent=0
    _
  %s8 = ssub.s32 1, %s6
  %s9 = scalar_select 0, %s8, %s6
  $region1: #{tpu_custom_call.1} parent=0
    #allocation2 [shape = 'u8[28672]{0}', space=vmem, size = 0x7000, scoped, tag = 'output window, operand 0, single buffered']
    #allocation3 [shape = 's32[1]{0}', space=sflag, size = 0x4, scoped, tag = 'scoped memory for tpu_custom_call.1']
    %10 = vsyncpa [#allocation3], 0
    // Predicated region
    $region2: #{tpu_custom_call.1} parent=1 // pred_check
      _
    $region3: #{tpu_custom_call.1} parent=1 // pred_check_branch
      %12 = sbr.rel (0) target = $region5
    $region4: #{tpu_custom_call.1} parent=1 // pred_region
      _
    $region5: #{tpu_custom_call.1} parent=1 // pred_fallthru
      _
    // Predicated region
    $region6: #{tpu_custom_call.1} parent=1 // pred_check
      _
    $region7: #{tpu_custom_call.1} parent=1 // pred_check_branch
      %14 = sbr.rel (0) target = $region9
    $region8: #{tpu_custom_call.1} parent=1 // pred_region
      _
    $region9: #{tpu_custom_call.1} parent=1 // pred_fallthru
      _
    // Predicated region
    $region10: #{tpu_custom_call.1} parent=1 // pred_check
      _
    $region11: #{tpu_custom_call.1} parent=1 // pred_check_branch
      %16 = sbr.rel (0) target = $region13
    $region12: #{tpu_custom_call.1} parent=1 // pred_region
      _
    $region13: #{tpu_custom_call.1} parent=1 // pred_fallthru
      _
    // Predicated region
    $region14: #{tpu_custom_call.1} parent=1 // pred_check
      _
    $region15: #{tpu_custom_call.1} parent=1 // pred_check_branch
      %18 = sbr.rel (0) target = $region17
    $region16: #{tpu_custom_call.1} parent=1 // pred_region
      _
    $region17: #{tpu_custom_call.1} parent=1 // pred_fallthru
      _
    // Predicated region
    $region18: #{tpu_custom_call.1} parent=1 // pred_check
      _
    $region19: #{tpu_custom_call.1} parent=1 // pred_check_branch
      %20 = sbr.rel (0) target = $region21
    $region20: #{tpu_custom_call.1} parent=1 // pred_region
      _
    $region21: #{tpu_custom_call.1} parent=1 // pred_fallthru
      _
    %v22 = vld [vmem:[%s0] sm:$0xff]
    %v23 = vpack.c.bf16 %v22, %v22
    %v24 = vld [vmem:[%s1] sm:$0xff]
    %v25 = vld [vmem:[%s1 + $0x8] sm:$0xff]
    %v26 = vld [vmem:[%s1 + $0x10] sm:$0xff]
    %v27 = vld [vmem:[%s1 + $0x18] sm:$0xff]
    %v28 = vld [vmem:[%s1 + $0x20] sm:$0x33]
    %v29 = vld [vmem:[%s1 + $0x28] sm:$0x33]
    %v30 = vld [vmem:[%s2] sm:$0xf]
    %v32 = vlaneseq
    %v33 = vshrl.u32 %v32, 7
    %v34 = vsub.s32 0, %v33
    %v35 = vrot.slane %v30, %v34
    %v36 = vlaneseq
    %v37 = vshrl.u32 %v36, 7
    %v38 = vsub.s32 1, %v37
    %v39 = vrot.slane %v30, %v38
    %v40 = vlaneseq
    %v41 = vshrl.u32 %v40, 7
    %v42 = vsub.s32 2, %v41
    %v43 = vrot.slane %v30, %v42
    %v44 = vlaneseq
    %v45 = vshrl.u32 %v44, 7
    %v46 = vsub.s32 3, %v45
    %v47 = vrot.slane %v30, %v46
    %v58 = vunpack.c.l.b16 %v24
    %v59 = vunpack.c.h.b16 %v24
    %v60 = vunpack.c.l.b16 %v25
    %v61 = vunpack.c.h.b16 %v25
    %v62 = vunpack.c.l.b16 %v26
    %v63 = vunpack.c.h.b16 %v26
    %v64 = vunpack.c.l.b16 %v27
    %v65 = vunpack.c.h.b16 %v27
    %v66 = vunpack.c.l.b16 %v28
    %v67 = vunpack.c.h.b16 %v28
    %v68 = vunpack.c.l.b16 %v29
    %v69 = vunpack.c.h.b16 %v29
    %v70 = vpack.c.b16 %v62, %v58
    %v71 = vpack.c.b16 %v63, %v59
    %v72 = vpack.c.b16 %v64, %v60
    %v73 = vpack.c.b16 %v65, %v61
    %v74 = vpack.c.b16 %v66, %v66
    %v75 = vpack.c.b16 %v67, %v67
    %v76 = vpack.c.b16 %v68, %v68
    %v77 = vpack.c.b16 %v69, %v69
    %vm82 = vcmask 162816
    %v84 = vsel %vm82, %v23, 0
    %vm86 = vcmask 1041408
    %v88 = vsel %vm86, %v74, 0
    %v91 = vsel %vm86, %v75, 0
    %v94 = vsel %vm86, %v76, 0
    %v97 = vsel %vm86, %v77, 0
    %99 = vmatprep.subr.bf16.mxu0 0
    %100 = vmatpush1.bf16.msra.mxu0 0
    %101 = vmatprep.subr.bf16.mxu0 0
    %102 = vmatpush1.bf16.msra.mxu0 0
    %103 = vmatprep.subr.bf16.mxu0 0
    %104 = vmatpush1.bf16.msra.mxu0 0
    %105 = vmatprep.subr.bf16.mxu0 0
    %106 = vmatpush1.bf16.msra.mxu0 0
    %107 = vmatprep.subr.bf16.mxu0 0
    %108 = vmatpush1.bf16.msra.mxu0 0
    %109 = vmatprep.subr.bf16.mxu0 0
    %110 = vmatpush1.bf16.msra.mxu0 0
    %111 = vmatprep.subr.bf16.mxu0 %v91
    %112 = vmatpush1.bf16.msra.mxu0 %v88
    %113 = vmatprep.subr.bf16.mxu0 %v71
    %114 = vmatpush1.bf16.msra.mxu0 %v70
    %115 = vmatprep.subr.bf16.mxu0 0
    %116 = vmatpush2.bf16.msra.mxu0 0
    %117 = vmatprep.subr.bf16.mxu0 0
    %118 = vmatpush2.bf16.msra.mxu0 0
    %119 = vmatprep.subr.bf16.mxu0 0
    %120 = vmatpush2.bf16.msra.mxu0 0
    %121 = vmatprep.subr.bf16.mxu0 0
    %122 = vmatpush2.bf16.msra.mxu0 0
    %123 = vmatprep.subr.bf16.mxu0 0
    %124 = vmatpush2.bf16.msra.mxu0 0
    %125 = vmatprep.subr.bf16.mxu0 0
    %126 = vmatpush2.bf16.msra.mxu0 0
    %127 = vmatprep.subr.bf16.mxu0 0
    %128 = vmatpush2.bf16.msra.mxu0 0
    %129 = vmatprep.subr.bf16.mxu0 0
    %130 = vmatpush2.bf16.msra.mxu0 0
    %131 = vmatprep.mubr.bf16.mxu0 0
    %132 = vmatmul.mubr.bf16.gmra.mxu0 %v84
    %v133 = vpop.f32.mrf.mxu0
    %v134 = vadd.f32 %v35, %v133
    %v135 = vpop.f32.mrf.mxu0
    %v136 = vadd.f32 %v39, %v135
    %v137 = vpop.f32.mrf.mxu0
    %v138 = vpop.f32.mrf.mxu0
    %139 = vdwg.mxu0
    %140 = vmatprep.subr.bf16.mxu0 0
    %141 = vmatpush1.bf16.msra.mxu0 0
    %142 = vmatprep.subr.bf16.mxu0 0
    %143 = vmatpush1.bf16.msra.mxu0 0
    %144 = vmatprep.subr.bf16.mxu0 0
    %145 = vmatpush1.bf16.msra.mxu0 0
    %146 = vmatprep.subr.bf16.mxu0 0
    %147 = vmatpush1.bf16.msra.mxu0 0
    %148 = vmatprep.subr.bf16.mxu0 0
    %149 = vmatpush1.bf16.msra.mxu0 0
    %150 = vmatprep.subr.bf16.mxu0 0
    %151 = vmatpush1.bf16.msra.mxu0 0
    %152 = vmatprep.subr.bf16.mxu0 %v97
    %153 = vmatpush1.bf16.msra.mxu0 %v94
    %154 = vmatprep.subr.bf16.mxu0 %v73
    %155 = vmatpush1.bf16.msra.mxu0 %v72
    %156 = vmatprep.subr.bf16.mxu0 0
    %157 = vmatpush2.bf16.msra.mxu0 0
    %158 = vmatprep.subr.bf16.mxu0 0
    %159 = vmatpush2.bf16.msra.mxu0 0
    %160 = vmatprep.subr.bf16.mxu0 0
    %161 = vmatpush2.bf16.msra.mxu0 0
    %162 = vmatprep.subr.bf16.mxu0 0
    %163 = vmatpush2.bf16.msra.mxu0 0
    %164 = vmatprep.subr.bf16.mxu0 0
    %165 = vmatpush2.bf16.msra.mxu0 0
    %166 = vmatprep.subr.bf16.mxu0 0
    %167 = vmatpush2.bf16.msra.mxu0 0
    %168 = vmatprep.subr.bf16.mxu0 0
    %169 = vmatpush2.bf16.msra.mxu0 0
    %170 = vmatprep.subr.bf16.mxu0 0
    %171 = vmatpush2.bf16.msra.mxu0 0
    %172 = vmatprep.mubr.bf16.mxu0 0
    %173 = vmatmul.mubr.bf16.gmra.mxu0 %v84
    %v174 = vpop.f32.mrf.mxu0
    %v175 = vadd.f32 %v43, %v174
    %v176 = vpop.f32.mrf.mxu0
    %v177 = vadd.f32 %v47, %v176
    %v178 = vpop.f32.mrf.mxu0
    %v179 = vpop.f32.mrf.mxu0
    %180 = vdwg.mxu0
    %v181 = vmax.f32 %v134, 0.0
    %v182 = vmax.f32 %v136, 0.0
    %v183 = vmax.f32 %v175, 0.0
    %v184 = vmax.f32 %v177, 0.0
    %v185 = vpack.c.bf16 %v181, %v181
    %v186 = vpack.c.bf16 %v182, %v182
    %v187 = vpack.c.bf16 %v183, %v183
    %v188 = vpack.c.bf16 %v184, %v184
    %v189 = vld [vmem:[%s3] sm:$0xff]
    %v190 = vld [vmem:[%s3 + $0x8] sm:$0xff]
    %v191 = vld [vmem:[%s3 + $0x10] sm:$0xff]
    %v192 = vld [vmem:[%s3 + $0x18] sm:$0xf]
    %v193 = vld [vmem:[%s3 + $0x1c] sm:$0xff]
    %v194 = vld [vmem:[%s3 + $0x24] sm:$0xff]
    %v195 = vld [vmem:[%s3 + $0x2c] sm:$0xff]
    %v196 = vld [vmem:[%s3 + $0x34] sm:$0xf]
    %v197 = vld [vmem:[%s3 + $0x38] sm:$0xff]
    %v198 = vld [vmem:[%s3 + $0x40] sm:$0xff]
    %v199 = vld [vmem:[%s3 + $0x48] sm:$0xff]
    %v200 = vld [vmem:[%s3 + $0x50] sm:$0xf]
    %v201 = vld [vmem:[%s3 + $0x54] sm:$0xff]
    %v202 = vld [vmem:[%s3 + $0x5c] sm:$0xff]
    %v203 = vld [vmem:[%s3 + $0x64] sm:$0xff]
    %v204 = vld [vmem:[%s3 + $0x6c] sm:$0xf]
    %v205 = vld [vmem:[%s3 + $0x70] sm:$0xff]
    %v206 = vld [vmem:[%s3 + $0x78] sm:$0xff]
    %v207 = vld [vmem:[%s3 + $0x80] sm:$0xff]
    %v208 = vld [vmem:[%s3 + $0x88] sm:$0xf]
    %v209 = vld [vmem:[%s3 + $0x8c] sm:$0xff]
    %v210 = vld [vmem:[%s3 + $0x94] sm:$0xff]
    %v211 = vld [vmem:[%s3 + $0x9c] sm:$0xff]
    %v212 = vld [vmem:[%s3 + $0xa4] sm:$0xf]
    %v213 = vld [vmem:[%s3 + $0xa8] sm:$0xff]
    %v214 = vld [vmem:[%s3 + $0xb0] sm:$0xff]
    %v215 = vld [vmem:[%s3 + $0xb8] sm:$0xff]
    %v216 = vld [vmem:[%s3 + $0xc0] sm:$0xf]
    %v217 = vld [vmem:[%s3 + $0xc4] sm:$0xff]
    %v218 = vld [vmem:[%s3 + $0xcc] sm:$0xff]
    %v219 = vld [vmem:[%s3 + $0xd4] sm:$0xff]
    %v220 = vld [vmem:[%s3 + $0xdc] sm:$0xf]
    %v221 = vld [vmem:[%s3 + $0xe0] sm:$0xff]
    %v222 = vld [vmem:[%s3 + $0xe8] sm:$0xff]
    %v223 = vld [vmem:[%s3 + $0xf0] sm:$0xff]
    %v224 = vld [vmem:[%s3 + $0xf8] sm:$0xf]
    %v225 = vld [vmem:[%s3 + $0xfc] sm:$0xff]
    %v226 = vld [vmem:[%s3 + $0x104] sm:$0xff]
    %v227 = vld [vmem:[%s3 + $0x10c] sm:$0xff]
    %v228 = vld [vmem:[%s3 + $0x114] sm:$0xf]
    %v229 = vld [vmem:[%s3 + $0x118] sm:$0xff]
    %v230 = vld [vmem:[%s3 + $0x120] sm:$0xff]
    %v231 = vld [vmem:[%s3 + $0x128] sm:$0xff]
    %v232 = vld [vmem:[%s3 + $0x130] sm:$0xf]
    %v233 = vld [vmem:[%s3 + $0x134] sm:$0xff]
    %v234 = vld [vmem:[%s3 + $0x13c] sm:$0xff]
    %v235 = vld [vmem:[%s3 + $0x144] sm:$0xff]
    %v236 = vld [vmem:[%s3 + $0x14c] sm:$0xf]
    %v237 = vld [vmem:[%s3 + $0x150] sm:$0xff]
    %v238 = vld [vmem:[%s3 + $0x158] sm:$0xff]
    %v239 = vld [vmem:[%s3 + $0x160] sm:$0xff]
    %v240 = vld [vmem:[%s3 + $0x168] sm:$0xf]
    %v241 = vld [vmem:[%s3 + $0x16c] sm:$0xff]
    %v242 = vld [vmem:[%s3 + $0x174] sm:$0xff]
    %v243 = vld [vmem:[%s3 + $0x17c] sm:$0xff]
    %v244 = vld [vmem:[%s3 + $0x184] sm:$0xf]
    %v245 = vld [vmem:[%s3 + $0x188] sm:$0xff]
    %v246 = vld [vmem:[%s3 + $0x190] sm:$0xff]
    %v247 = vld [vmem:[%s3 + $0x198] sm:$0xff]
    %v248 = vld [vmem:[%s3 + $0x1a0] sm:$0xf]
    %v249 = vld [vmem:[%s3 + $0x1a4] sm:$0xff]
    %v250 = vld [vmem:[%s3 + $0x1ac] sm:$0xff]
    %v251 = vld [vmem:[%s3 + $0x1b4] sm:$0xff]
    %v252 = vld [vmem:[%s3 + $0x1bc] sm:$0xf]
    %v253 = vld [vmem:[%s3 + $0x1c0] sm:$0xff]
    %v254 = vld [vmem:[%s3 + $0x1c8] sm:$0xff]
    %v255 = vld [vmem:[%s3 + $0x1d0] sm:$0xff]
    %v256 = vld [vmem:[%s3 + $0x1d8] sm:$0xf]
    %v257 = vld [vmem:[%s3 + $0x1dc] sm:$0xff]
    %v258 = vld [vmem:[%s3 + $0x1e4] sm:$0xff]
    %v259 = vld [vmem:[%s3 + $0x1ec] sm:$0xff]
    %v260 = vld [vmem:[%s3 + $0x1f4] sm:$0xf]
    %v261 = vld [vmem:[%s3 + $0x1f8] sm:$0xff]
    %v262 = vld [vmem:[%s3 + $0x200] sm:$0xff]
    %v263 = vld [vmem:[%s3 + $0x208] sm:$0xff]
    %v264 = vld [vmem:[%s3 + $0x210] sm:$0xf]
    %v265 = vld [vmem:[%s3 + $0x214] sm:$0xff]
    %v266 = vld [vmem:[%s3 + $0x21c] sm:$0xff]
    %v267 = vld [vmem:[%s3 + $0x224] sm:$0xff]
    %v268 = vld [vmem:[%s3 + $0x22c] sm:$0xf]
    %v269 = vld [vmem:[%s3 + $0x230] sm:$0xff]
    %v270 = vld [vmem:[%s3 + $0x238] sm:$0xff]
    %v271 = vld [vmem:[%s3 + $0x240] sm:$0xff]
    %v272 = vld [vmem:[%s3 + $0x248] sm:$0xf]
    %v273 = vld [vmem:[%s3 + $0x24c] sm:$0xff]
    %v274 = vld [vmem:[%s3 + $0x254] sm:$0xff]
    %v275 = vld [vmem:[%s3 + $0x25c] sm:$0xff]
    %v276 = vld [vmem:[%s3 + $0x264] sm:$0xf]
    %v277 = vld [vmem:[%s3 + $0x268] sm:$0xff]
    %v278 = vld [vmem:[%s3 + $0x270] sm:$0xff]
    %v279 = vld [vmem:[%s3 + $0x278] sm:$0xff]
    %v280 = vld [vmem:[%s3 + $0x280] sm:$0xf]
    %v281 = vld [vmem:[%s3 + $0x284] sm:$0xff]
    %v282 = vld [vmem:[%s3 + $0x28c] sm:$0xff]
    %v283 = vld [vmem:[%s3 + $0x294] sm:$0xff]
    %v284 = vld [vmem:[%s3 + $0x29c] sm:$0xf]
    %v285 = vld [vmem:[%s3 + $0x2a0] sm:$0xff]
    %v286 = vld [vmem:[%s3 + $0x2a8] sm:$0xff]
    %v287 = vld [vmem:[%s3 + $0x2b0] sm:$0xff]
    %v288 = vld [vmem:[%s3 + $0x2b8] sm:$0xf]
    %v289 = vld [vmem:[%s3 + $0x2bc] sm:$0xff]
    %v290 = vld [vmem:[%s3 + $0x2c4] sm:$0xff]
    %v291 = vld [vmem:[%s3 + $0x2cc] sm:$0xff]
    %v292 = vld [vmem:[%s3 + $0x2d4] sm:$0xf]
    %v293 = vld [vmem:[%s3 + $0x2d8] sm:$0xff]
    %v294 = vld [vmem:[%s3 + $0x2e0] sm:$0xff]
    %v295 = vld [vmem:[%s3 + $0x2e8] sm:$0xff]
    %v296 = vld [vmem:[%s3 + $0x2f0] sm:$0xf]
    %v297 = vld [vmem:[%s3 + $0x2f4] sm:$0xff]
    %v298 = vld [vmem:[%s3 + $0x2fc] sm:$0xff]
    %v299 = vld [vmem:[%s3 + $0x304] sm:$0xff]
    %v300 = vld [vmem:[%s3 + $0x30c] sm:$0xf]
    %v301 = vld [vmem:[%s3 + $0x310] sm:$0xff]
    %v302 = vld [vmem:[%s3 + $0x318] sm:$0xff]
    %v303 = vld [vmem:[%s3 + $0x320] sm:$0xff]
    %v304 = vld [vmem:[%s3 + $0x328] sm:$0xf]
    %v305 = vld [vmem:[%s3 + $0x32c] sm:$0xff]
    %v306 = vld [vmem:[%s3 + $0x334] sm:$0xff]
    %v307 = vld [vmem:[%s3 + $0x33c] sm:$0xff]
    %v308 = vld [vmem:[%s3 + $0x344] sm:$0xf]
    %v309 = vld [vmem:[%s3 + $0x348] sm:$0xff]
    %v310 = vld [vmem:[%s3 + $0x350] sm:$0xff]
    %v311 = vld [vmem:[%s3 + $0x358] sm:$0xff]
    %v312 = vld [vmem:[%s3 + $0x360] sm:$0xf]
    %v313 = vld [vmem:[%s3 + $0x364] sm:$0xff]
    %v314 = vld [vmem:[%s3 + $0x36c] sm:$0xff]
    %v315 = vld [vmem:[%s3 + $0x374] sm:$0xff]
    %v316 = vld [vmem:[%s3 + $0x37c] sm:$0xf]
    %v317 = vld [vmem:[%s3 + $0x380] sm:$0xff]
    %v318 = vld [vmem:[%s3 + $0x388] sm:$0xff]
    %v319 = vld [vmem:[%s3 + $0x390] sm:$0xff]
    %v320 = vld [vmem:[%s3 + $0x398] sm:$0xf]
    %v321 = vld [vmem:[%s3 + $0x39c] sm:$0xff]
    %v322 = vld [vmem:[%s3 + $0x3a4] sm:$0xff]
    %v323 = vld [vmem:[%s3 + $0x3ac] sm:$0xff]
    %v324 = vld [vmem:[%s3 + $0x3b4] sm:$0xf]
    %v325 = vld [vmem:[%s3 + $0x3b8] sm:$0xff]
    %v326 = vld [vmem:[%s3 + $0x3c0] sm:$0xff]
    %v327 = vld [vmem:[%s3 + $0x3c8] sm:$0xff]
    %v328 = vld [vmem:[%s3 + $0x3d0] sm:$0xf]
    %v329 = vld [vmem:[%s3 + $0x3d4] sm:$0xff]
    %v330 = vld [vmem:[%s3 + $0x3dc] sm:$0xff]
    %v331 = vld [vmem:[%s3 + $0x3e4] sm:$0xff]
    %v332 = vld [vmem:[%s3 + $0x3ec] sm:$0xf]
    %v333 = vld [vmem:[%s3 + $0x3f0] sm:$0xff]
    %v334 = vld [vmem:[%s3 + $0x3f8] sm:$0xff]
    %v335 = vld [vmem:[%s3 + $0x400] sm:$0xff]
    %v336 = vld [vmem:[%s3 + $0x408] sm:$0xf]
    %v337 = vld [vmem:[%s3 + $0x40c] sm:$0xff]
    %v338 = vld [vmem:[%s3 + $0x414] sm:$0xff]
    %v339 = vld [vmem:[%s3 + $0x41c] sm:$0xff]
    %v340 = vld [vmem:[%s3 + $0x424] sm:$0xf]
    %v341 = vld [vmem:[%s3 + $0x428] sm:$0xff]
    %v342 = vld [vmem:[%s3 + $0x430] sm:$0xff]
    %v343 = vld [vmem:[%s3 + $0x438] sm:$0xff]
    %v344 = vld [vmem:[%s3 + $0x440] sm:$0xf]
    %v345 = vld [vmem:[%s3 + $0x444] sm:$0xff]
    %v346 = vld [vmem:[%s3 + $0x44c] sm:$0xff]
    %v347 = vld [vmem:[%s3 + $0x454] sm:$0xff]
    %v348 = vld [vmem:[%s3 + $0x45c] sm:$0xf]
    %v349 = vld [vmem:[%s3 + $0x460] sm:$0xff]
    %v350 = vld [vmem:[%s3 + $0x468] sm:$0xff]
    %v351 = vld [vmem:[%s3 + $0x470] sm:$0xff]
    %v352 = vld [vmem:[%s3 + $0x478] sm:$0xf]
    %v353 = vld [vmem:[%s3 + $0x47c] sm:$0xff]
    %v354 = vld [vmem:[%s3 + $0x484] sm:$0xff]
    %v355 = vld [vmem:[%s3 + $0x48c] sm:$0xff]
    %v356 = vld [vmem:[%s3 + $0x494] sm:$0xf]
    %v357 = vld [vmem:[%s3 + $0x498] sm:$0xff]
    %v358 = vld [vmem:[%s3 + $0x4a0] sm:$0xff]
    %v359 = vld [vmem:[%s3 + $0x4a8] sm:$0xff]
    %v360 = vld [vmem:[%s3 + $0x4b0] sm:$0xf]
    %v361 = vld [vmem:[%s3 + $0x4b4] sm:$0xff]
    %v362 = vld [vmem:[%s3 + $0x4bc] sm:$0xff]
    %v363 = vld [vmem:[%s3 + $0x4c4] sm:$0xff]
    %v364 = vld [vmem:[%s3 + $0x4cc] sm:$0xf]
    %v365 = vld [vmem:[%s3 + $0x4d0] sm:$0xff]
    %v366 = vld [vmem:[%s3 + $0x4d8] sm:$0xff]
    %v367 = vld [vmem:[%s3 + $0x4e0] sm:$0xff]
    %v368 = vld [vmem:[%s3 + $0x4e8] sm:$0xf]
    %v369 = vld [vmem:[%s3 + $0x4ec] sm:$0xff]
    %v370 = vld [vmem:[%s3 + $0x4f4] sm:$0xff]
    %v371 = vld [vmem:[%s3 + $0x4fc] sm:$0xff]
    %v372 = vld [vmem:[%s3 + $0x504] sm:$0xf]
    %v373 = vld [vmem:[%s3 + $0x508] sm:$0xff]
    %v374 = vld [vmem:[%s3 + $0x510] sm:$0xff]
    %v375 = vld [vmem:[%s3 + $0x518] sm:$0xff]
    %v376 = vld [vmem:[%s3 + $0x520] sm:$0xf]
    %v377 = vld [vmem:[%s3 + $0x524] sm:$0xff]
    %v378 = vld [vmem:[%s3 + $0x52c] sm:$0xff]
    %v379 = vld [vmem:[%s3 + $0x534] sm:$0xff]
    %v380 = vld [vmem:[%s3 + $0x53c] sm:$0xf]
    %v381 = vld [vmem:[%s3 + $0x540] sm:$0xff]
    %v382 = vld [vmem:[%s3 + $0x548] sm:$0xff]
    %v383 = vld [vmem:[%s3 + $0x550] sm:$0xff]
    %v384 = vld [vmem:[%s3 + $0x558] sm:$0xf]
    %v385 = vld [vmem:[%s3 + $0x55c] sm:$0xff]
    %v386 = vld [vmem:[%s3 + $0x564] sm:$0xff]
    %v387 = vld [vmem:[%s3 + $0x56c] sm:$0xff]
    %v388 = vld [vmem:[%s3 + $0x574] sm:$0xf]
    %v389 = vld [vmem:[%s3 + $0x578] sm:$0xff]
    %v390 = vld [vmem:[%s3 + $0x580] sm:$0xff]
    %v391 = vld [vmem:[%s3 + $0x588] sm:$0xff]
    %v392 = vld [vmem:[%s3 + $0x590] sm:$0xf]
    %v393 = vld [vmem:[%s3 + $0x594] sm:$0xff]
    %v394 = vld [vmem:[%s3 + $0x59c] sm:$0xff]
    %v395 = vld [vmem:[%s3 + $0x5a4] sm:$0xff]
    %v396 = vld [vmem:[%s3 + $0x5ac] sm:$0xf]
    %v397 = vld [vmem:[%s3 + $0x5b0] sm:$0xff]
    %v398 = vld [vmem:[%s3 + $0x5b8] sm:$0xff]
    %v399 = vld [vmem:[%s3 + $0x5c0] sm:$0xff]
    %v400 = vld [vmem:[%s3 + $0x5c8] sm:$0xf]
    %v401 = vld [vmem:[%s3 + $0x5cc] sm:$0xff]
    %v402 = vld [vmem:[%s3 + $0x5d4] sm:$0xff]
    %v403 = vld [vmem:[%s3 + $0x5dc] sm:$0xff]
    %v404 = vld [vmem:[%s3 + $0x5e4] sm:$0xf]
    %v405 = vld [vmem:[%s3 + $0x5e8] sm:$0xff]
    %v406 = vld [vmem:[%s3 + $0x5f0] sm:$0xff]
    %v407 = vld [vmem:[%s3 + $0x5f8] sm:$0xff]
    %v408 = vld [vmem:[%s3 + $0x600] sm:$0xf]
    %v409 = vld [vmem:[%s3 + $0x604] sm:$0xff]
    %v410 = vld [vmem:[%s3 + $0x60c] sm:$0xff]
    %v411 = vld [vmem:[%s3 + $0x614] sm:$0xff]
    %v412 = vld [vmem:[%s3 + $0x61c] sm:$0xf]
    %v413 = vld [vmem:[%s3 + $0x620] sm:$0xff]
    %v414 = vld [vmem:[%s3 + $0x628] sm:$0xff]
    %v415 = vld [vmem:[%s3 + $0x630] sm:$0xff]
    %v416 = vld [vmem:[%s3 + $0x638] sm:$0xf]
    %v417 = vld [vmem:[%s3 + $0x63c] sm:$0xff]
    %v418 = vld [vmem:[%s3 + $0x644] sm:$0xff]
    %v419 = vld [vmem:[%s3 + $0x64c] sm:$0xff]
    %v420 = vld [vmem:[%s3 + $0x654] sm:$0xf]
    %v421 = vld [vmem:[%s3 + $0x658] sm:$0xff]
    %v422 = vld [vmem:[%s3 + $0x660] sm:$0xff]
    %v423 = vld [vmem:[%s3 + $0x668] sm:$0xff]
    %v424 = vld [vmem:[%s3 + $0x670] sm:$0xf]
    %v425 = vld [vmem:[%s3 + $0x674] sm:$0xff]
    %v426 = vld [vmem:[%s3 + $0x67c] sm:$0xff]
    %v427 = vld [vmem:[%s3 + $0x684] sm:$0xff]
    %v428 = vld [vmem:[%s3 + $0x68c] sm:$0xf]
    %v429 = vld [vmem:[%s3 + $0x690] sm:$0xff]
    %v430 = vld [vmem:[%s3 + $0x698] sm:$0xff]
    %v431 = vld [vmem:[%s3 + $0x6a0] sm:$0xff]
    %v432 = vld [vmem:[%s3 + $0x6a8] sm:$0xf]
    %v433 = vld [vmem:[%s3 + $0x6ac] sm:$0xff]
    %v434 = vld [vmem:[%s3 + $0x6b4] sm:$0xff]
    %v435 = vld [vmem:[%s3 + $0x6bc] sm:$0xff]
    %v436 = vld [vmem:[%s3 + $0x6c4] sm:$0xf]
    %v437 = vld [vmem:[%s3 + $0x6c8] sm:$0x33]
    %v438 = vld [vmem:[%s3 + $0x6d0] sm:$0x33]
    %v439 = vld [vmem:[%s3 + $0x6d8] sm:$0x33]
    %v440 = vld [vmem:[%s3 + $0x6e0] sm:$0x3]
    %v441 = vld [vmem:[%s4] sm:$0x7f]
    %v443 = vlaneseq
    %v444 = vshrl.u32 %v443, 7
    %v445 = vsub.s32 0, %v444
    %v446 = vrot.slane %v441, %v445
    %v447 = vlaneseq
    %v448 = vshrl.u32 %v447, 7
    %v449 = vsub.s32 1, %v448
    %v450 = vrot.slane %v441, %v449
    %v451 = vlaneseq
    %v452 = vshrl.u32 %v451, 7
    %v453 = vsub.s32 2, %v452
    %v454 = vrot.slane %v441, %v453
    %v455 = vlaneseq
    %v456 = vshrl.u32 %v455, 7
    %v457 = vsub.s32 3, %v456
    %v458 = vrot.slane %v441, %v457
    %v459 = vlaneseq
    %v460 = vshrl.u32 %v459, 7
    %v461 = vsub.s32 4, %v460
    %v462 = vrot.slane %v441, %v461
    %v463 = vlaneseq
    %v464 = vshrl.u32 %v463, 7
    %v465 = vsub.s32 5, %v464
    %v466 = vrot.slane %v441, %v465
    %v467 = vlaneseq
    %v468 = vshrl.u32 %v467, 7
    %v469 = vsub.s32 6, %v468
    %v470 = vrot.slane %v441, %v469
    %v730 = vunpack.c.l.b16 %v189
    %v731 = vunpack.c.h.b16 %v189
    %v732 = vunpack.c.l.b16 %v190
    %v733 = vunpack.c.h.b16 %v190
    %v734 = vunpack.c.l.b16 %v191
    %v735 = vunpack.c.h.b16 %v191
    %v736 = vunpack.c.l.b16 %v192
    %v737 = vunpack.c.l.b16 %v193
    %v738 = vunpack.c.h.b16 %v193
    %v739 = vunpack.c.l.b16 %v194
    %v740 = vunpack.c.h.b16 %v194
    %v741 = vunpack.c.l.b16 %v195
    %v742 = vunpack.c.h.b16 %v195
    %v743 = vunpack.c.l.b16 %v196
    %v744 = vunpack.c.l.b16 %v197
    %v745 = vunpack.c.h.b16 %v197
    %v746 = vunpack.c.l.b16 %v198
    %v747 = vunpack.c.h.b16 %v198
    %v748 = vunpack.c.l.b16 %v199
    %v749 = vunpack.c.h.b16 %v199
    %v750 = vunpack.c.l.b16 %v200
    %v751 = vunpack.c.l.b16 %v201
    %v752 = vunpack.c.h.b16 %v201
    %v753 = vunpack.c.l.b16 %v202
    %v754 = vunpack.c.h.b16 %v202
    %v755 = vunpack.c.l.b16 %v203
    %v756 = vunpack.c.h.b16 %v203
    %v757 = vunpack.c.l.b16 %v204
    %v758 = vunpack.c.l.b16 %v205
    %v759 = vunpack.c.h.b16 %v205
    %v760 = vunpack.c.l.b16 %v206
    %v761 = vunpack.c.h.b16 %v206
    %v762 = vunpack.c.l.b16 %v207
    %v763 = vunpack.c.h.b16 %v207
    %v764 = vunpack.c.l.b16 %v208
    %v765 = vunpack.c.l.b16 %v209
    %v766 = vunpack.c.h.b16 %v209
    %v767 = vunpack.c.l.b16 %v210
    %v768 = vunpack.c.h.b16 %v210
    %v769 = vunpack.c.l.b16 %v211
    %v770 = vunpack.c.h.b16 %v211
    %v771 = vunpack.c.l.b16 %v212
    %v772 = vunpack.c.l.b16 %v213
    %v773 = vunpack.c.h.b16 %v213
    %v774 = vunpack.c.l.b16 %v214
    %v775 = vunpack.c.h.b16 %v214
    %v776 = vunpack.c.l.b16 %v215
    %v777 = vunpack.c.h.b16 %v215
    %v778 = vunpack.c.l.b16 %v216
    %v779 = vunpack.c.l.b16 %v217
    %v780 = vunpack.c.h.b16 %v217
    %v781 = vunpack.c.l.b16 %v218
    %v782 = vunpack.c.h.b16 %v218
    %v783 = vunpack.c.l.b16 %v219
    %v784 = vunpack.c.h.b16 %v219
    %v785 = vunpack.c.l.b16 %v220
    %v786 = vunpack.c.l.b16 %v221
    %v787 = vunpack.c.h.b16 %v221
    %v788 = vunpack.c.l.b16 %v222
    %v789 = vunpack.c.h.b16 %v222
    %v790 = vunpack.c.l.b16 %v223
    %v791 = vunpack.c.h.b16 %v223
    %v792 = vunpack.c.l.b16 %v224
    %v793 = vunpack.c.l.b16 %v225
    %v794 = vunpack.c.h.b16 %v225
    %v795 = vunpack.c.l.b16 %v226
    %v796 = vunpack.c.h.b16 %v226
    %v797 = vunpack.c.l.b16 %v227
    %v798 = vunpack.c.h.b16 %v227
    %v799 = vunpack.c.l.b16 %v228
    %v800 = vunpack.c.l.b16 %v229
    %v801 = vunpack.c.h.b16 %v229
    %v802 = vunpack.c.l.b16 %v230
    %v803 = vunpack.c.h.b16 %v230
    %v804 = vunpack.c.l.b16 %v231
    %v805 = vunpack.c.h.b16 %v231
    %v806 = vunpack.c.l.b16 %v232
    %v807 = vunpack.c.l.b16 %v233
    %v808 = vunpack.c.h.b16 %v233
    %v809 = vunpack.c.l.b16 %v234
    %v810 = vunpack.c.h.b16 %v234
    %v811 = vunpack.c.l.b16 %v235
    %v812 = vunpack.c.h.b16 %v235
    %v813 = vunpack.c.l.b16 %v236
    %v814 = vunpack.c.l.b16 %v237
    %v815 = vunpack.c.h.b16 %v237
    %v816 = vunpack.c.l.b16 %v238
    %v817 = vunpack.c.h.b16 %v238
    %v818 = vunpack.c.l.b16 %v239
    %v819 = vunpack.c.h.b16 %v239
    %v820 = vunpack.c.l.b16 %v240
    %v821 = vunpack.c.l.b16 %v241
    %v822 = vunpack.c.h.b16 %v241
    %v823 = vunpack.c.l.b16 %v242
    %v824 = vunpack.c.h.b16 %v242
    %v825 = vunpack.c.l.b16 %v243
    %v826 = vunpack.c.h.b16 %v243
    %v827 = vunpack.c.l.b16 %v244
    %v828 = vunpack.c.l.b16 %v245
    %v829 = vunpack.c.h.b16 %v245
    %v830 = vunpack.c.l.b16 %v246
    %v831 = vunpack.c.h.b16 %v246
    %v832 = vunpack.c.l.b16 %v247
    %v833 = vunpack.c.h.b16 %v247
    %v834 = vunpack.c.l.b16 %v248
    %v835 = vunpack.c.l.b16 %v249
    %v836 = vunpack.c.h.b16 %v249
    %v837 = vunpack.c.l.b16 %v250
    %v838 = vunpack.c.h.b16 %v250
    %v839 = vunpack.c.l.b16 %v251
    %v840 = vunpack.c.h.b16 %v251
    %v841 = vunpack.c.l.b16 %v252
    %v842 = vunpack.c.l.b16 %v253
    %v843 = vunpack.c.h.b16 %v253
    %v844 = vunpack.c.l.b16 %v254
    %v845 = vunpack.c.h.b16 %v254
    %v846 = vunpack.c.l.b16 %v255
    %v847 = vunpack.c.h.b16 %v255
    %v848 = vunpack.c.l.b16 %v256
    %v849 = vunpack.c.l.b16 %v257
    %v850 = vunpack.c.h.b16 %v257
    %v851 = vunpack.c.l.b16 %v258
    %v852 = vunpack.c.h.b16 %v258
    %v853 = vunpack.c.l.b16 %v259
    %v854 = vunpack.c.h.b16 %v259
    %v855 = vunpack.c.l.b16 %v260
    %v856 = vunpack.c.l.b16 %v261
    %v857 = vunpack.c.h.b16 %v261
    %v858 = vunpack.c.l.b16 %v262
    %v859 = vunpack.c.h.b16 %v262
    %v860 = vunpack.c.l.b16 %v263
    %v861 = vunpack.c.h.b16 %v263
    %v862 = vunpack.c.l.b16 %v264
    %v863 = vunpack.c.l.b16 %v265
    %v864 = vunpack.c.h.b16 %v265
    %v865 = vunpack.c.l.b16 %v266
    %v866 = vunpack.c.h.b16 %v266
    %v867 = vunpack.c.l.b16 %v267
    %v868 = vunpack.c.h.b16 %v267
    %v869 = vunpack.c.l.b16 %v268
    %v870 = vunpack.c.l.b16 %v269
    %v871 = vunpack.c.h.b16 %v269
    %v872 = vunpack.c.l.b16 %v270
    %v873 = vunpack.c.h.b16 %v270
    %v874 = vunpack.c.l.b16 %v271
    %v875 = vunpack.c.h.b16 %v271
    %v876 = vunpack.c.l.b16 %v272
    %v877 = vunpack.c.l.b16 %v273
    %v878 = vunpack.c.h.b16 %v273
    %v879 = vunpack.c.l.b16 %v274
    %v880 = vunpack.c.h.b16 %v274
    %v881 = vunpack.c.l.b16 %v275
    %v882 = vunpack.c.h.b16 %v275
    %v883 = vunpack.c.l.b16 %v276
    %v884 = vunpack.c.l.b16 %v277
    %v885 = vunpack.c.h.b16 %v277
    %v886 = vunpack.c.l.b16 %v278
    %v887 = vunpack.c.h.b16 %v278
    %v888 = vunpack.c.l.b16 %v279
    %v889 = vunpack.c.h.b16 %v279
    %v890 = vunpack.c.l.b16 %v280
    %v891 = vunpack.c.l.b16 %v281
    %v892 = vunpack.c.h.b16 %v281
    %v893 = vunpack.c.l.b16 %v282
    %v894 = vunpack.c.h.b16 %v282
    %v895 = vunpack.c.l.b16 %v283
    %v896 = vunpack.c.h.b16 %v283
    %v897 = vunpack.c.l.b16 %v284
    %v898 = vunpack.c.l.b16 %v285
    %v899 = vunpack.c.h.b16 %v285
    %v900 = vunpack.c.l.b16 %v286
    %v901 = vunpack.c.h.b16 %v286
    %v902 = vunpack.c.l.b16 %v287
    %v903 = vunpack.c.h.b16 %v287
    %v904 = vunpack.c.l.b16 %v288
    %v905 = vunpack.c.l.b16 %v289
    %v906 = vunpack.c.h.b16 %v289
    %v907 = vunpack.c.l.b16 %v290
    %v908 = vunpack.c.h.b16 %v290
    %v909 = vunpack.c.l.b16 %v291
    %v910 = vunpack.c.h.b16 %v291
    %v911 = vunpack.c.l.b16 %v292
    %v912 = vunpack.c.l.b16 %v293
    %v913 = vunpack.c.h.b16 %v293
    %v914 = vunpack.c.l.b16 %v294
    %v915 = vunpack.c.h.b16 %v294
    %v916 = vunpack.c.l.b16 %v295
    %v917 = vunpack.c.h.b16 %v295
    %v918 = vunpack.c.l.b16 %v296
    %v919 = vunpack.c.l.b16 %v297
    %v920 = vunpack.c.h.b16 %v297
    %v921 = vunpack.c.l.b16 %v298
    %v922 = vunpack.c.h.b16 %v298
    %v923 = vunpack.c.l.b16 %v299
    %v924 = vunpack.c.h.b16 %v299
    %v925 = vunpack.c.l.b16 %v300
    %v926 = vunpack.c.l.b16 %v301
    %v927 = vunpack.c.h.b16 %v301
    %v928 = vunpack.c.l.b16 %v302
    %v929 = vunpack.c.h.b16 %v302
    %v930 = vunpack.c.l.b16 %v303
    %v931 = vunpack.c.h.b16 %v303
    %v932 = vunpack.c.l.b16 %v304
    %v933 = vunpack.c.l.b16 %v305
    %v934 = vunpack.c.h.b16 %v305
    %v935 = vunpack.c.l.b16 %v306
    %v936 = vunpack.c.h.b16 %v306
    %v937 = vunpack.c.l.b16 %v307
    %v938 = vunpack.c.h.b16 %v307
    %v939 = vunpack.c.l.b16 %v308
    %v940 = vunpack.c.l.b16 %v309
    %v941 = vunpack.c.h.b16 %v309
    %v942 = vunpack.c.l.b16 %v310
    %v943 = vunpack.c.h.b16 %v310
    %v944 = vunpack.c.l.b16 %v311
    %v945 = vunpack.c.h.b16 %v311
    %v946 = vunpack.c.l.b16 %v312
    %v947 = vunpack.c.l.b16 %v313
    %v948 = vunpack.c.h.b16 %v313
    %v949 = vunpack.c.l.b16 %v314
    %v950 = vunpack.c.h.b16 %v314
    %v951 = vunpack.c.l.b16 %v315
    %v952 = vunpack.c.h.b16 %v315
    %v953 = vunpack.c.l.b16 %v316
    %v954 = vunpack.c.l.b16 %v317
    %v955 = vunpack.c.h.b16 %v317
    %v956 = vunpack.c.l.b16 %v318
    %v957 = vunpack.c.h.b16 %v318
    %v958 = vunpack.c.l.b16 %v319
    %v959 = vunpack.c.h.b16 %v319
    %v960 = vunpack.c.l.b16 %v320
    %v961 = vunpack.c.l.b16 %v321
    %v962 = vunpack.c.h.b16 %v321
    %v963 = vunpack.c.l.b16 %v322
    %v964 = vunpack.c.h.b16 %v322
    %v965 = vunpack.c.l.b16 %v323
    %v966 = vunpack.c.h.b16 %v323
    %v967 = vunpack.c.l.b16 %v324
    %v968 = vunpack.c.l.b16 %v325
    %v969 = vunpack.c.h.b16 %v325
    %v970 = vunpack.c.l.b16 %v326
    %v971 = vunpack.c.h.b16 %v326
    %v972 = vunpack.c.l.b16 %v327
    %v973 = vunpack.c.h.b16 %v327
    %v974 = vunpack.c.l.b16 %v328
    %v975 = vunpack.c.l.b16 %v329
    %v976 = vunpack.c.h.b16 %v329
    %v977 = vunpack.c.l.b16 %v330
    %v978 = vunpack.c.h.b16 %v330
    %v979 = vunpack.c.l.b16 %v331
    %v980 = vunpack.c.h.b16 %v331
    %v981 = vunpack.c.l.b16 %v332
    %v982 = vunpack.c.l.b16 %v333
    %v983 = vunpack.c.h.b16 %v333
    %v984 = vunpack.c.l.b16 %v334
    %v985 = vunpack.c.h.b16 %v334
    %v986 = vunpack.c.l.b16 %v335
    %v987 = vunpack.c.h.b16 %v335
    %v988 = vunpack.c.l.b16 %v336
    %v989 = vunpack.c.l.b16 %v337
    %v990 = vunpack.c.h.b16 %v337
    %v991 = vunpack.c.l.b16 %v338
    %v992 = vunpack.c.h.b16 %v338
    %v993 = vunpack.c.l.b16 %v339
    %v994 = vunpack.c.h.b16 %v339
    %v995 = vunpack.c.l.b16 %v340
    %v996 = vunpack.c.l.b16 %v341
    %v997 = vunpack.c.h.b16 %v341
    %v998 = vunpack.c.l.b16 %v342
    %v999 = vunpack.c.h.b16 %v342
    %v1000 = vunpack.c.l.b16 %v343
    %v1001 = vunpack.c.h.b16 %v343
    %v1002 = vunpack.c.l.b16 %v344
    %v1003 = vunpack.c.l.b16 %v345
    %v1004 = vunpack.c.h.b16 %v345
    %v1005 = vunpack.c.l.b16 %v346
    %v1006 = vunpack.c.h.b16 %v346
    %v1007 = vunpack.c.l.b16 %v347
    %v1008 = vunpack.c.h.b16 %v347
    %v1009 = vunpack.c.l.b16 %v348
    %v1010 = vunpack.c.l.b16 %v349
    %v1011 = vunpack.c.h.b16 %v349
    %v1012 = vunpack.c.l.b16 %v350
    %v1013 = vunpack.c.h.b16 %v350
    %v1014 = vunpack.c.l.b16 %v351
    %v1015 = vunpack.c.h.b16 %v351
    %v1016 = vunpack.c.l.b16 %v352
    %v1017 = vunpack.c.l.b16 %v353
    %v1018 = vunpack.c.h.b16 %v353
    %v1019 = vunpack.c.l.b16 %v354
    %v1020 = vunpack.c.h.b16 %v354
    %v1021 = vunpack.c.l.b16 %v355
    %v1022 = vunpack.c.h.b16 %v355
    %v1023 = vunpack.c.l.b16 %v356
    %v1024 = vunpack.c.l.b16 %v357
    %v1025 = vunpack.c.h.b16 %v357
    %v1026 = vunpack.c.l.b16 %v358
    %v1027 = vunpack.c.h.b16 %v358
    %v1028 = vunpack.c.l.b16 %v359
    %v1029 = vunpack.c.h.b16 %v359
    %v1030 = vunpack.c.l.b16 %v360
    %v1031 = vunpack.c.l.b16 %v361
    %v1032 = vunpack.c.h.b16 %v361
    %v1033 = vunpack.c.l.b16 %v362
    %v1034 = vunpack.c.h.b16 %v362
    %v1035 = vunpack.c.l.b16 %v363
    %v1036 = vunpack.c.h.b16 %v363
    %v1037 = vunpack.c.l.b16 %v364
    %v1038 = vunpack.c.l.b16 %v365
    %v1039 = vunpack.c.h.b16 %v365
    %v1040 = vunpack.c.l.b16 %v366
    %v1041 = vunpack.c.h.b16 %v366
    %v1042 = vunpack.c.l.b16 %v367
    %v1043 = vunpack.c.h.b16 %v367
    %v1044 = vunpack.c.l.b16 %v368
    %v1045 = vunpack.c.l.b16 %v369
    %v1046 = vunpack.c.h.b16 %v369
    %v1047 = vunpack.c.l.b16 %v370
    %v1048 = vunpack.c.h.b16 %v370
    %v1049 = vunpack.c.l.b16 %v371
    %v1050 = vunpack.c.h.b16 %v371
    %v1051 = vunpack.c.l.b16 %v372
    %v1052 = vunpack.c.l.b16 %v373
    %v1053 = vunpack.c.h.b16 %v373
    %v1054 = vunpack.c.l.b16 %v374
    %v1055 = vunpack.c.h.b16 %v374
    %v1056 = vunpack.c.l.b16 %v375
    %v1057 = vunpack.c.h.b16 %v375
    %v1058 = vunpack.c.l.b16 %v376
    %v1059 = vunpack.c.l.b16 %v377
    %v1060 = vunpack.c.h.b16 %v377
    %v1061 = vunpack.c.l.b16 %v378
    %v1062 = vunpack.c.h.b16 %v378
    %v1063 = vunpack.c.l.b16 %v379
    %v1064 = vunpack.c.h.b16 %v379
    %v1065 = vunpack.c.l.b16 %v380
    %v1066 = vunpack.c.l.b16 %v381
    %v1067 = vunpack.c.h.b16 %v381
    %v1068 = vunpack.c.l.b16 %v382
    %v1069 = vunpack.c.h.b16 %v382
    %v1070 = vunpack.c.l.b16 %v383
    %v1071 = vunpack.c.h.b16 %v383
    %v1072 = vunpack.c.l.b16 %v384
    %v1073 = vunpack.c.l.b16 %v385
    %v1074 = vunpack.c.h.b16 %v385
    %v1075 = vunpack.c.l.b16 %v386
    %v1076 = vunpack.c.h.b16 %v386
    %v1077 = vunpack.c.l.b16 %v387
    %v1078 = vunpack.c.h.b16 %v387
    %v1079 = vunpack.c.l.b16 %v388
    %v1080 = vunpack.c.l.b16 %v389
    %v1081 = vunpack.c.h.b16 %v389
    %v1082 = vunpack.c.l.b16 %v390
    %v1083 = vunpack.c.h.b16 %v390
    %v1084 = vunpack.c.l.b16 %v391
    %v1085 = vunpack.c.h.b16 %v391
    %v1086 = vunpack.c.l.b16 %v392
    %v1087 = vunpack.c.l.b16 %v393
    %v1088 = vunpack.c.h.b16 %v393
    %v1089 = vunpack.c.l.b16 %v394
    %v1090 = vunpack.c.h.b16 %v394
    %v1091 = vunpack.c.l.b16 %v395
    %v1092 = vunpack.c.h.b16 %v395
    %v1093 = vunpack.c.l.b16 %v396
    %v1094 = vunpack.c.l.b16 %v397
    %v1095 = vunpack.c.h.b16 %v397
    %v1096 = vunpack.c.l.b16 %v398
    %v1097 = vunpack.c.h.b16 %v398
    %v1098 = vunpack.c.l.b16 %v399
    %v1099 = vunpack.c.h.b16 %v399
    %v1100 = vunpack.c.l.b16 %v400
    %v1101 = vunpack.c.l.b16 %v401
    %v1102 = vunpack.c.h.b16 %v401
    %v1103 = vunpack.c.l.b16 %v402
    %v1104 = vunpack.c.h.b16 %v402
    %v1105 = vunpack.c.l.b16 %v403
    %v1106 = vunpack.c.h.b16 %v403
    %v1107 = vunpack.c.l.b16 %v404
    %v1108 = vunpack.c.l.b16 %v405
    %v1109 = vunpack.c.h.b16 %v405
    %v1110 = vunpack.c.l.b16 %v406
    %v1111 = vunpack.c.h.b16 %v406
    %v1112 = vunpack.c.l.b16 %v407
    %v1113 = vunpack.c.h.b16 %v407
    %v1114 = vunpack.c.l.b16 %v408
    %v1115 = vunpack.c.l.b16 %v409
    %v1116 = vunpack.c.h.b16 %v409
    %v1117 = vunpack.c.l.b16 %v410
    %v1118 = vunpack.c.h.b16 %v410
    %v1119 = vunpack.c.l.b16 %v411
    %v1120 = vunpack.c.h.b16 %v411
    %v1121 = vunpack.c.l.b16 %v412
    %v1122 = vunpack.c.l.b16 %v413
    %v1123 = vunpack.c.h.b16 %v413
    %v1124 = vunpack.c.l.b16 %v414
    %v1125 = vunpack.c.h.b16 %v414
    %v1126 = vunpack.c.l.b16 %v415
    %v1127 = vunpack.c.h.b16 %v415
    %v1128 = vunpack.c.l.b16 %v416
    %v1129 = vunpack.c.l.b16 %v417
    %v1130 = vunpack.c.h.b16 %v417
    %v1131 = vunpack.c.l.b16 %v418
    %v1132 = vunpack.c.h.b16 %v418
    %v1133 = vunpack.c.l.b16 %v419
    %v1134 = vunpack.c.h.b16 %v419
    %v1135 = vunpack.c.l.b16 %v420
    %v1136 = vunpack.c.l.b16 %v421
    %v1137 = vunpack.c.h.b16 %v421
    %v1138 = vunpack.c.l.b16 %v422
    %v1139 = vunpack.c.h.b16 %v422
    %v1140 = vunpack.c.l.b16 %v423
    %v1141 = vunpack.c.h.b16 %v423
    %v1142 = vunpack.c.l.b16 %v424
    %v1143 = vunpack.c.l.b16 %v425
    %v1144 = vunpack.c.h.b16 %v425
    %v1145 = vunpack.c.l.b16 %v426
    %v1146 = vunpack.c.h.b16 %v426
    %v1147 = vunpack.c.l.b16 %v427
    %v1148 = vunpack.c.h.b16 %v427
    %v1149 = vunpack.c.l.b16 %v428
    %v1150 = vunpack.c.l.b16 %v429
    %v1151 = vunpack.c.h.b16 %v429
    %v1152 = vunpack.c.l.b16 %v430
    %v1153 = vunpack.c.h.b16 %v430
    %v1154 = vunpack.c.l.b16 %v431
    %v1155 = vunpack.c.h.b16 %v431
    %v1156 = vunpack.c.l.b16 %v432
    %v1157 = vunpack.c.l.b16 %v433
    %v1158 = vunpack.c.h.b16 %v433
    %v1159 = vunpack.c.l.b16 %v434
    %v1160 = vunpack.c.h.b16 %v434
    %v1161 = vunpack.c.l.b16 %v435
    %v1162 = vunpack.c.h.b16 %v435
    %v1163 = vunpack.c.l.b16 %v436
    %v1164 = vunpack.c.l.b16 %v437
    %v1165 = vunpack.c.h.b16 %v437
    %v1166 = vunpack.c.l.b16 %v438
    %v1167 = vunpack.c.h.b16 %v438
    %v1168 = vunpack.c.l.b16 %v439
    %v1169 = vunpack.c.h.b16 %v439
    %v1170 = vunpack.c.l.b16 %v440
    %v1171 = vpack.c.b16 %v737, %v730
    %v1172 = vpack.c.b16 %v738, %v731
    %v1173 = vpack.c.b16 %v739, %v732
    %v1174 = vpack.c.b16 %v740, %v733
    %v1175 = vpack.c.b16 %v741, %v734
    %v1176 = vpack.c.b16 %v742, %v735
    %v1177 = vpack.c.b16 %v743, %v736
    %v1178 = vpack.c.b16 %v751, %v744
    %v1179 = vpack.c.b16 %v752, %v745
    %v1180 = vpack.c.b16 %v753, %v746
    %v1181 = vpack.c.b16 %v754, %v747
    %v1182 = vpack.c.b16 %v755, %v748
    %v1183 = vpack.c.b16 %v756, %v749
    %v1184 = vpack.c.b16 %v757, %v750
    %v1185 = vpack.c.b16 %v765, %v758
    %v1186 = vpack.c.b16 %v766, %v759
    %v1187 = vpack.c.b16 %v767, %v760
    %v1188 = vpack.c.b16 %v768, %v761
    %v1189 = vpack.c.b16 %v769, %v762
    %v1190 = vpack.c.b16 %v770, %v763
    %v1191 = vpack.c.b16 %v771, %v764
    %v1192 = vpack.c.b16 %v779, %v772
    %v1193 = vpack.c.b16 %v780, %v773
    %v1194 = vpack.c.b16 %v781, %v774
    %v1195 = vpack.c.b16 %v782, %v775
    %v1196 = vpack.c.b16 %v783, %v776
    %v1197 = vpack.c.b16 %v784, %v777
    %v1198 = vpack.c.b16 %v785, %v778
    %v1199 = vpack.c.b16 %v793, %v786
    %v1200 = vpack.c.b16 %v794, %v787
    %v1201 = vpack.c.b16 %v795, %v788
    %v1202 = vpack.c.b16 %v796, %v789
    %v1203 = vpack.c.b16 %v797, %v790
    %v1204 = vpack.c.b16 %v798, %v791
    %v1205 = vpack.c.b16 %v799, %v792
    %v1206 = vpack.c.b16 %v807, %v800
    %v1207 = vpack.c.b16 %v808, %v801
    %v1208 = vpack.c.b16 %v809, %v802
    %v1209 = vpack.c.b16 %v810, %v803
    %v1210 = vpack.c.b16 %v811, %v804
    %v1211 = vpack.c.b16 %v812, %v805
    %v1212 = vpack.c.b16 %v813, %v806
    %v1213 = vpack.c.b16 %v821, %v814
    %v1214 = vpack.c.b16 %v822, %v815
    %v1215 = vpack.c.b16 %v823, %v816
    %v1216 = vpack.c.b16 %v824, %v817
    %v1217 = vpack.c.b16 %v825, %v818
    %v1218 = vpack.c.b16 %v826, %v819
    %v1219 = vpack.c.b16 %v827, %v820
    %v1220 = vpack.c.b16 %v835, %v828
    %v1221 = vpack.c.b16 %v836, %v829
    %v1222 = vpack.c.b16 %v837, %v830
    %v1223 = vpack.c.b16 %v838, %v831
    %v1224 = vpack.c.b16 %v839, %v832
    %v1225 = vpack.c.b16 %v840, %v833
    %v1226 = vpack.c.b16 %v841, %v834
    %v1227 = vpack.c.b16 %v849, %v842
    %v1228 = vpack.c.b16 %v850, %v843
    %v1229 = vpack.c.b16 %v851, %v844
    %v1230 = vpack.c.b16 %v852, %v845
    %v1231 = vpack.c.b16 %v853, %v846
    %v1232 = vpack.c.b16 %v854, %v847
    %v1233 = vpack.c.b16 %v855, %v848
    %v1234 = vpack.c.b16 %v863, %v856
    %v1235 = vpack.c.b16 %v864, %v857
    %v1236 = vpack.c.b16 %v865, %v858
    %v1237 = vpack.c.b16 %v866, %v859
    %v1238 = vpack.c.b16 %v867, %v860
    %v1239 = vpack.c.b16 %v868, %v861
    %v1240 = vpack.c.b16 %v869, %v862
    %v1241 = vpack.c.b16 %v877, %v870
    %v1242 = vpack.c.b16 %v878, %v871
    %v1243 = vpack.c.b16 %v879, %v872
    %v1244 = vpack.c.b16 %v880, %v873
    %v1245 = vpack.c.b16 %v881, %v874
    %v1246 = vpack.c.b16 %v882, %v875
    %v1247 = vpack.c.b16 %v883, %v876
    %v1248 = vpack.c.b16 %v891, %v884
    %v1249 = vpack.c.b16 %v892, %v885
    %v1250 = vpack.c.b16 %v893, %v886
    %v1251 = vpack.c.b16 %v894, %v887
    %v1252 = vpack.c.b16 %v895, %v888
    %v1253 = vpack.c.b16 %v896, %v889
    %v1254 = vpack.c.b16 %v897, %v890
    %v1255 = vpack.c.b16 %v905, %v898
    %v1256 = vpack.c.b16 %v906, %v899
    %v1257 = vpack.c.b16 %v907, %v900
    %v1258 = vpack.c.b16 %v908, %v901
    %v1259 = vpack.c.b16 %v909, %v902
    %v1260 = vpack.c.b16 %v910, %v903
    %v1261 = vpack.c.b16 %v911, %v904
    %v1262 = vpack.c.b16 %v919, %v912
    %v1263 = vpack.c.b16 %v920, %v913
    %v1264 = vpack.c.b16 %v921, %v914
    %v1265 = vpack.c.b16 %v922, %v915
    %v1266 = vpack.c.b16 %v923, %v916
    %v1267 = vpack.c.b16 %v924, %v917
    %v1268 = vpack.c.b16 %v925, %v918
    %v1269 = vpack.c.b16 %v933, %v926
    %v1270 = vpack.c.b16 %v934, %v927
    %v1271 = vpack.c.b16 %v935, %v928
    %v1272 = vpack.c.b16 %v936, %v929
    %v1273 = vpack.c.b16 %v937, %v930
    %v1274 = vpack.c.b16 %v938, %v931
    %v1275 = vpack.c.b16 %v939, %v932
    %v1276 = vpack.c.b16 %v947, %v940
    %v1277 = vpack.c.b16 %v948, %v941
    %v1278 = vpack.c.b16 %v949, %v942
    %v1279 = vpack.c.b16 %v950, %v943
    %v1280 = vpack.c.b16 %v951, %v944
    %v1281 = vpack.c.b16 %v952, %v945
    %v1282 = vpack.c.b16 %v953, %v946
    %v1283 = vpack.c.b16 %v961, %v954
    %v1284 = vpack.c.b16 %v962, %v955
    %v1285 = vpack.c.b16 %v963, %v956
    %v1286 = vpack.c.b16 %v964, %v957
    %v1287 = vpack.c.b16 %v965, %v958
    %v1288 = vpack.c.b16 %v966, %v959
    %v1289 = vpack.c.b16 %v967, %v960
    %v1290 = vpack.c.b16 %v975, %v968
    %v1291 = vpack.c.b16 %v976, %v969
    %v1292 = vpack.c.b16 %v977, %v970
    %v1293 = vpack.c.b16 %v978, %v971
    %v1294 = vpack.c.b16 %v979, %v972
    %v1295 = vpack.c.b16 %v980, %v973
    %v1296 = vpack.c.b16 %v981, %v974
    %v1297 = vpack.c.b16 %v989, %v982
    %v1298 = vpack.c.b16 %v990, %v983
    %v1299 = vpack.c.b16 %v991, %v984
    %v1300 = vpack.c.b16 %v992, %v985
    %v1301 = vpack.c.b16 %v993, %v986
    %v1302 = vpack.c.b16 %v994, %v987
    %v1303 = vpack.c.b16 %v995, %v988
    %v1304 = vpack.c.b16 %v1003, %v996
    %v1305 = vpack.c.b16 %v1004, %v997
    %v1306 = vpack.c.b16 %v1005, %v998
    %v1307 = vpack.c.b16 %v1006, %v999
    %v1308 = vpack.c.b16 %v1007, %v1000
    %v1309 = vpack.c.b16 %v1008, %v1001
    %v1310 = vpack.c.b16 %v1009, %v1002
    %v1311 = vpack.c.b16 %v1017, %v1010
    %v1312 = vpack.c.b16 %v1018, %v1011
    %v1313 = vpack.c.b16 %v1019, %v1012
    %v1314 = vpack.c.b16 %v1020, %v1013
    %v1315 = vpack.c.b16 %v1021, %v1014
    %v1316 = vpack.c.b16 %v1022, %v1015
    %v1317 = vpack.c.b16 %v1023, %v1016
    %v1318 = vpack.c.b16 %v1031, %v1024
    %v1319 = vpack.c.b16 %v1032, %v1025
    %v1320 = vpack.c.b16 %v1033, %v1026
    %v1321 = vpack.c.b16 %v1034, %v1027
    %v1322 = vpack.c.b16 %v1035, %v1028
    %v1323 = vpack.c.b16 %v1036, %v1029
    %v1324 = vpack.c.b16 %v1037, %v1030
    %v1325 = vpack.c.b16 %v1045, %v1038
    %v1326 = vpack.c.b16 %v1046, %v1039
    %v1327 = vpack.c.b16 %v1047, %v1040
    %v1328 = vpack.c.b16 %v1048, %v1041
    %v1329 = vpack.c.b16 %v1049, %v1042
    %v1330 = vpack.c.b16 %v1050, %v1043
    %v1331 = vpack.c.b16 %v1051, %v1044
    %v1332 = vpack.c.b16 %v1059, %v1052
    %v1333 = vpack.c.b16 %v1060, %v1053
    %v1334 = vpack.c.b16 %v1061, %v1054
    %v1335 = vpack.c.b16 %v1062, %v1055
    %v1336 = vpack.c.b16 %v1063, %v1056
    %v1337 = vpack.c.b16 %v1064, %v1057
    %v1338 = vpack.c.b16 %v1065, %v1058
    %v1339 = vpack.c.b16 %v1073, %v1066
    %v1340 = vpack.c.b16 %v1074, %v1067
    %v1341 = vpack.c.b16 %v1075, %v1068
    %v1342 = vpack.c.b16 %v1076, %v1069
    %v1343 = vpack.c.b16 %v1077, %v1070
    %v1344 = vpack.c.b16 %v1078, %v1071
    %v1345 = vpack.c.b16 %v1079, %v1072
    %v1346 = vpack.c.b16 %v1087, %v1080
    %v1347 = vpack.c.b16 %v1088, %v1081
    %v1348 = vpack.c.b16 %v1089, %v1082
    %v1349 = vpack.c.b16 %v1090, %v1083
    %v1350 = vpack.c.b16 %v1091, %v1084
    %v1351 = vpack.c.b16 %v1092, %v1085
    %v1352 = vpack.c.b16 %v1093, %v1086
    %v1353 = vpack.c.b16 %v1101, %v1094
    %v1354 = vpack.c.b16 %v1102, %v1095
    %v1355 = vpack.c.b16 %v1103, %v1096
    %v1356 = vpack.c.b16 %v1104, %v1097
    %v1357 = vpack.c.b16 %v1105, %v1098
    %v1358 = vpack.c.b16 %v1106, %v1099
    %v1359 = vpack.c.b16 %v1107, %v1100
    %v1360 = vpack.c.b16 %v1115, %v1108
    %v1361 = vpack.c.b16 %v1116, %v1109
    %v1362 = vpack.c.b16 %v1117, %v1110
    %v1363 = vpack.c.b16 %v1118, %v1111
    %v1364 = vpack.c.b16 %v1119, %v1112
    %v1365 = vpack.c.b16 %v1120, %v1113
    %v1366 = vpack.c.b16 %v1121, %v1114
    %v1367 = vpack.c.b16 %v1129, %v1122
    %v1368 = vpack.c.b16 %v1130, %v1123
    %v1369 = vpack.c.b16 %v1131, %v1124
    %v1370 = vpack.c.b16 %v1132, %v1125
    %v1371 = vpack.c.b16 %v1133, %v1126
    %v1372 = vpack.c.b16 %v1134, %v1127
    %v1373 = vpack.c.b16 %v1135, %v1128
    %v1374 = vpack.c.b16 %v1143, %v1136
    %v1375 = vpack.c.b16 %v1144, %v1137
    %v1376 = vpack.c.b16 %v1145, %v1138
    %v1377 = vpack.c.b16 %v1146, %v1139
    %v1378 = vpack.c.b16 %v1147, %v1140
    %v1379 = vpack.c.b16 %v1148, %v1141
    %v1380 = vpack.c.b16 %v1149, %v1142
    %v1381 = vpack.c.b16 %v1157, %v1150
    %v1382 = vpack.c.b16 %v1158, %v1151
    %v1383 = vpack.c.b16 %v1159, %v1152
    %v1384 = vpack.c.b16 %v1160, %v1153
    %v1385 = vpack.c.b16 %v1161, %v1154
    %v1386 = vpack.c.b16 %v1162, %v1155
    %v1387 = vpack.c.b16 %v1163, %v1156
    %v1388 = vpack.c.b16 %v1164, %v1164
    %v1389 = vpack.c.b16 %v1165, %v1165
    %v1390 = vpack.c.b16 %v1166, %v1166
    %v1391 = vpack.c.b16 %v1167, %v1167
    %v1392 = vpack.c.b16 %v1168, %v1168
    %v1393 = vpack.c.b16 %v1169, %v1169
    %v1394 = vpack.c.b16 %v1170, %v1170
    %vm1612 = vcmask 949248
    %v1614 = vsel %vm1612, %v188, 0
    %v1617 = vsel %vm86, %v1388, 0
    %v1620 = vsel %vm86, %v1389, 0
    %v1623 = vsel %vm86, %v1390, 0
    %v1626 = vsel %vm86, %v1391, 0
    %v1629 = vsel %vm86, %v1392, 0
    %v1632 = vsel %vm86, %v1393, 0
    %v1635 = vsel %vm86, %v1394, 0
    %1637 = vmatprep.subr.bf16.mxu0 %v1221
    %1638 = vmatpush1.bf16.msra.mxu0 %v1220
    %1639 = vmatprep.subr.bf16.mxu0 %v1214
    %1640 = vmatpush1.bf16.msra.mxu0 %v1213
    %1641 = vmatprep.subr.bf16.mxu0 %v1207
    %1642 = vmatpush1.bf16.msra.mxu0 %v1206
    %1643 = vmatprep.subr.bf16.mxu0 %v1200
    %1644 = vmatpush1.bf16.msra.mxu0 %v1199
    %1645 = vmatprep.subr.bf16.mxu0 %v1193
    %1646 = vmatpush1.bf16.msra.mxu0 %v1192
    %1647 = vmatprep.subr.bf16.mxu0 %v1186
    %1648 = vmatpush1.bf16.msra.mxu0 %v1185
    %1649 = vmatprep.subr.bf16.mxu0 %v1179
    %1650 = vmatpush1.bf16.msra.mxu0 %v1178
    %1651 = vmatprep.subr.bf16.mxu0 %v1172
    %1652 = vmatpush1.bf16.msra.mxu0 %v1171
    %1653 = vmatprep.subr.bf16.mxu0 %v1277
    %1654 = vmatpush2.bf16.msra.mxu0 %v1276
    %1655 = vmatprep.subr.bf16.mxu0 %v1270
    %1656 = vmatpush2.bf16.msra.mxu0 %v1269
    %1657 = vmatprep.subr.bf16.mxu0 %v1263
    %1658 = vmatpush2.bf16.msra.mxu0 %v1262
    %1659 = vmatprep.subr.bf16.mxu0 %v1256
    %1660 = vmatpush2.bf16.msra.mxu0 %v1255
    %1661 = vmatprep.subr.bf16.mxu0 %v1249
    %1662 = vmatpush2.bf16.msra.mxu0 %v1248
    %1663 = vmatprep.subr.bf16.mxu0 %v1242
    %1664 = vmatpush2.bf16.msra.mxu0 %v1241
    %1665 = vmatprep.subr.bf16.mxu0 %v1235
    %1666 = vmatpush2.bf16.msra.mxu0 %v1234
    %1667 = vmatprep.subr.bf16.mxu0 %v1228
    %1668 = vmatpush2.bf16.msra.mxu0 %v1227
    %1669 = vmatprep.mubr.bf16.mxu0 %v186
    %1670 = vmatmul.mubr.bf16.gmra.mxu0 %v185
    %v1671 = vpop.f32.mrf.mxu0
    %v1672 = vadd.f32 %v446, %v1671
    %v1673 = vpop.f32.mrf.mxu0
    %v1674 = vadd.f32 %v450, %v1673
    %v1675 = vpop.f32.mrf.mxu0
    %v1676 = vpop.f32.mrf.mxu0
    %1677 = vdwg.mxu0
    %1678 = vmatprep.subr.bf16.mxu0 %v1333
    %1679 = vmatpush1.bf16.msra.mxu0 %v1332
    %1680 = vmatprep.subr.bf16.mxu0 %v1326
    %1681 = vmatpush1.bf16.msra.mxu0 %v1325
    %1682 = vmatprep.subr.bf16.mxu0 %v1319
    %1683 = vmatpush1.bf16.msra.mxu0 %v1318
    %1684 = vmatprep.subr.bf16.mxu0 %v1312
    %1685 = vmatpush1.bf16.msra.mxu0 %v1311
    %1686 = vmatprep.subr.bf16.mxu0 %v1305
    %1687 = vmatpush1.bf16.msra.mxu0 %v1304
    %1688 = vmatprep.subr.bf16.mxu0 %v1298
    %1689 = vmatpush1.bf16.msra.mxu0 %v1297
    %1690 = vmatprep.subr.bf16.mxu0 %v1291
    %1691 = vmatpush1.bf16.msra.mxu0 %v1290
    %1692 = vmatprep.subr.bf16.mxu0 %v1284
    %1693 = vmatpush1.bf16.msra.mxu0 %v1283
    %1694 = vmatprep.subr.bf16.mxu0 %v1620
    %1695 = vmatpush2.bf16.msra.mxu0 %v1617
    %1696 = vmatprep.subr.bf16.mxu0 %v1382
    %1697 = vmatpush2.bf16.msra.mxu0 %v1381
    %1698 = vmatprep.subr.bf16.mxu0 %v1375
    %1699 = vmatpush2.bf16.msra.mxu0 %v1374
    %1700 = vmatprep.subr.bf16.mxu0 %v1368
    %1701 = vmatpush2.bf16.msra.mxu0 %v1367
    %1702 = vmatprep.subr.bf16.mxu0 %v1361
    %1703 = vmatpush2.bf16.msra.mxu0 %v1360
    %1704 = vmatprep.subr.bf16.mxu0 %v1354
    %1705 = vmatpush2.bf16.msra.mxu0 %v1353
    %1706 = vmatprep.subr.bf16.mxu0 %v1347
    %1707 = vmatpush2.bf16.msra.mxu0 %v1346
    %1708 = vmatprep.subr.bf16.mxu0 %v1340
    %1709 = vmatpush2.bf16.msra.mxu0 %v1339
    %1710 = vmatprep.mubr.bf16.mxu0 %v1614
    %1711 = vmatmul.mubr.bf16.gmra.mxu0 %v187
    %v1712 = vpop.f32.mrf.mxu0
    %v1713 = vadd.f32 %v1672, %v1712
    %v1714 = vpop.f32.mrf.mxu0
    %v1715 = vadd.f32 %v1674, %v1714
    %v1716 = vpop.f32.mrf.mxu0
    %v1717 = vpop.f32.mrf.mxu0
    %1718 = vdwg.mxu0
    %1719 = vmatprep.subr.bf16.mxu0 %v1223
    %1720 = vmatpush1.bf16.msra.mxu0 %v1222
    %1721 = vmatprep.subr.bf16.mxu0 %v1216
    %1722 = vmatpush1.bf16.msra.mxu0 %v1215
    %1723 = vmatprep.subr.bf16.mxu0 %v1209
    %1724 = vmatpush1.bf16.msra.mxu0 %v1208
    %1725 = vmatprep.subr.bf16.mxu0 %v1202
    %1726 = vmatpush1.bf16.msra.mxu0 %v1201
    %1727 = vmatprep.subr.bf16.mxu0 %v1195
    %1728 = vmatpush1.bf16.msra.mxu0 %v1194
    %1729 = vmatprep.subr.bf16.mxu0 %v1188
    %1730 = vmatpush1.bf16.msra.mxu0 %v1187
    %1731 = vmatprep.subr.bf16.mxu0 %v1181
    %1732 = vmatpush1.bf16.msra.mxu0 %v1180
    %1733 = vmatprep.subr.bf16.mxu0 %v1174
    %1734 = vmatpush1.bf16.msra.mxu0 %v1173
    %1735 = vmatprep.subr.bf16.mxu0 %v1279
    %1736 = vmatpush2.bf16.msra.mxu0 %v1278
    %1737 = vmatprep.subr.bf16.mxu0 %v1272
    %1738 = vmatpush2.bf16.msra.mxu0 %v1271
    %1739 = vmatprep.subr.bf16.mxu0 %v1265
    %1740 = vmatpush2.bf16.msra.mxu0 %v1264
    %1741 = vmatprep.subr.bf16.mxu0 %v1258
    %1742 = vmatpush2.bf16.msra.mxu0 %v1257
    %1743 = vmatprep.subr.bf16.mxu0 %v1251
    %1744 = vmatpush2.bf16.msra.mxu0 %v1250
    %1745 = vmatprep.subr.bf16.mxu0 %v1244
    %1746 = vmatpush2.bf16.msra.mxu0 %v1243
    %1747 = vmatprep.subr.bf16.mxu0 %v1237
    %1748 = vmatpush2.bf16.msra.mxu0 %v1236
    %1749 = vmatprep.subr.bf16.mxu0 %v1230
    %1750 = vmatpush2.bf16.msra.mxu0 %v1229
    %1751 = vmatprep.mubr.bf16.mxu0 %v186
    %1752 = vmatmul.mubr.bf16.gmra.mxu0 %v185
    %v1753 = vpop.f32.mrf.mxu0
    %v1754 = vadd.f32 %v454, %v1753
    %v1755 = vpop.f32.mrf.mxu0
    %v1756 = vadd.f32 %v458, %v1755
    %v1757 = vpop.f32.mrf.mxu0
    %v1758 = vpop.f32.mrf.mxu0
    %1759 = vdwg.mxu0
    %1760 = vmatprep.subr.bf16.mxu0 %v1335
    %1761 = vmatpush1.bf16.msra.mxu0 %v1334
    %1762 = vmatprep.subr.bf16.mxu0 %v1328
    %1763 = vmatpush1.bf16.msra.mxu0 %v1327
    %1764 = vmatprep.subr.bf16.mxu0 %v1321
    %1765 = vmatpush1.bf16.msra.mxu0 %v1320
    %1766 = vmatprep.subr.bf16.mxu0 %v1314
    %1767 = vmatpush1.bf16.msra.mxu0 %v1313
    %1768 = vmatprep.subr.bf16.mxu0 %v1307
    %1769 = vmatpush1.bf16.msra.mxu0 %v1306
    %1770 = vmatprep.subr.bf16.mxu0 %v1300
    %1771 = vmatpush1.bf16.msra.mxu0 %v1299
    %1772 = vmatprep.subr.bf16.mxu0 %v1293
    %1773 = vmatpush1.bf16.msra.mxu0 %v1292
    %1774 = vmatprep.subr.bf16.mxu0 %v1286
    %1775 = vmatpush1.bf16.msra.mxu0 %v1285
    %1776 = vmatprep.subr.bf16.mxu0 %v1626
    %1777 = vmatpush2.bf16.msra.mxu0 %v1623
    %1778 = vmatprep.subr.bf16.mxu0 %v1384
    %1779 = vmatpush2.bf16.msra.mxu0 %v1383
    %1780 = vmatprep.subr.bf16.mxu0 %v1377
    %1781 = vmatpush2.bf16.msra.mxu0 %v1376
    %1782 = vmatprep.subr.bf16.mxu0 %v1370
    %1783 = vmatpush2.bf16.msra.mxu0 %v1369
    %1784 = vmatprep.subr.bf16.mxu0 %v1363
    %1785 = vmatpush2.bf16.msra.mxu0 %v1362
    %1786 = vmatprep.subr.bf16.mxu0 %v1356
    %1787 = vmatpush2.bf16.msra.mxu0 %v1355
    %1788 = vmatprep.subr.bf16.mxu0 %v1349
    %1789 = vmatpush2.bf16.msra.mxu0 %v1348
    %1790 = vmatprep.subr.bf16.mxu0 %v1342
    %1791 = vmatpush2.bf16.msra.mxu0 %v1341
    %1792 = vmatprep.mubr.bf16.mxu0 %v1614
    %1793 = vmatmul.mubr.bf16.gmra.mxu0 %v187
    %v1794 = vpop.f32.mrf.mxu0
    %v1795 = vadd.f32 %v1754, %v1794
    %v1796 = vpop.f32.mrf.mxu0
    %v1797 = vadd.f32 %v1756, %v1796
    %v1798 = vpop.f32.mrf.mxu0
    %v1799 = vpop.f32.mrf.mxu0
    %1800 = vdwg.mxu0
    %1801 = vmatprep.subr.bf16.mxu0 %v1225
    %1802 = vmatpush1.bf16.msra.mxu0 %v1224
    %1803 = vmatprep.subr.bf16.mxu0 %v1218
    %1804 = vmatpush1.bf16.msra.mxu0 %v1217
    %1805 = vmatprep.subr.bf16.mxu0 %v1211
    %1806 = vmatpush1.bf16.msra.mxu0 %v1210
    %1807 = vmatprep.subr.bf16.mxu0 %v1204
    %1808 = vmatpush1.bf16.msra.mxu0 %v1203
    %1809 = vmatprep.subr.bf16.mxu0 %v1197
    %1810 = vmatpush1.bf16.msra.mxu0 %v1196
    %1811 = vmatprep.subr.bf16.mxu0 %v1190
    %1812 = vmatpush1.bf16.msra.mxu0 %v1189
    %1813 = vmatprep.subr.bf16.mxu0 %v1183
    %1814 = vmatpush1.bf16.msra.mxu0 %v1182
    %1815 = vmatprep.subr.bf16.mxu0 %v1176
    %1816 = vmatpush1.bf16.msra.mxu0 %v1175
    %1817 = vmatprep.subr.bf16.mxu0 %v1281
    %1818 = vmatpush2.bf16.msra.mxu0 %v1280
    %1819 = vmatprep.subr.bf16.mxu0 %v1274
    %1820 = vmatpush2.bf16.msra.mxu0 %v1273
    %1821 = vmatprep.subr.bf16.mxu0 %v1267
    %1822 = vmatpush2.bf16.msra.mxu0 %v1266
    %1823 = vmatprep.subr.bf16.mxu0 %v1260
    %1824 = vmatpush2.bf16.msra.mxu0 %v1259
    %1825 = vmatprep.subr.bf16.mxu0 %v1253
    %1826 = vmatpush2.bf16.msra.mxu0 %v1252
    %1827 = vmatprep.subr.bf16.mxu0 %v1246
    %1828 = vmatpush2.bf16.msra.mxu0 %v1245
    %1829 = vmatprep.subr.bf16.mxu0 %v1239
    %1830 = vmatpush2.bf16.msra.mxu0 %v1238
    %1831 = vmatprep.subr.bf16.mxu0 %v1232
    %1832 = vmatpush2.bf16.msra.mxu0 %v1231
    %1833 = vmatprep.mubr.bf16.mxu0 %v186
    %1834 = vmatmul.mubr.bf16.gmra.mxu0 %v185
    %v1835 = vpop.f32.mrf.mxu0
    %v1836 = vadd.f32 %v462, %v1835
    %v1837 = vpop.f32.mrf.mxu0
    %v1838 = vadd.f32 %v466, %v1837
    %v1839 = vpop.f32.mrf.mxu0
    %v1840 = vpop.f32.mrf.mxu0
    %1841 = vdwg.mxu0
    %1842 = vmatprep.subr.bf16.mxu0 %v1337
    %1843 = vmatpush1.bf16.msra.mxu0 %v1336
    %1844 = vmatprep.subr.bf16.mxu0 %v1330
    %1845 = vmatpush1.bf16.msra.mxu0 %v1329
    %1846 = vmatprep.subr.bf16.mxu0 %v1323
    %1847 = vmatpush1.bf16.msra.mxu0 %v1322
    %1848 = vmatprep.subr.bf16.mxu0 %v1316
    %1849 = vmatpush1.bf16.msra.mxu0 %v1315
    %1850 = vmatprep.subr.bf16.mxu0 %v1309
    %1851 = vmatpush1.bf16.msra.mxu0 %v1308
    %1852 = vmatprep.subr.bf16.mxu0 %v1302
    %1853 = vmatpush1.bf16.msra.mxu0 %v1301
    %1854 = vmatprep.subr.bf16.mxu0 %v1295
    %1855 = vmatpush1.bf16.msra.mxu0 %v1294
    %1856 = vmatprep.subr.bf16.mxu0 %v1288
    %1857 = vmatpush1.bf16.msra.mxu0 %v1287
    %1858 = vmatprep.subr.bf16.mxu0 %v1632
    %1859 = vmatpush2.bf16.msra.mxu0 %v1629
    %1860 = vmatprep.subr.bf16.mxu0 %v1386
    %1861 = vmatpush2.bf16.msra.mxu0 %v1385
    %1862 = vmatprep.subr.bf16.mxu0 %v1379
    %1863 = vmatpush2.bf16.msra.mxu0 %v1378
    %1864 = vmatprep.subr.bf16.mxu0 %v1372
    %1865 = vmatpush2.bf16.msra.mxu0 %v1371
    %1866 = vmatprep.subr.bf16.mxu0 %v1365
    %1867 = vmatpush2.bf16.msra.mxu0 %v1364
    %1868 = vmatprep.subr.bf16.mxu0 %v1358
    %1869 = vmatpush2.bf16.msra.mxu0 %v1357
    %1870 = vmatprep.subr.bf16.mxu0 %v1351
    %1871 = vmatpush2.bf16.msra.mxu0 %v1350
    %1872 = vmatprep.subr.bf16.mxu0 %v1344
    %1873 = vmatpush2.bf16.msra.mxu0 %v1343
    %1874 = vmatprep.mubr.bf16.mxu0 %v1614
    %1875 = vmatmul.mubr.bf16.gmra.mxu0 %v187
    %v1876 = vpop.f32.mrf.mxu0
    %v1877 = vadd.f32 %v1836, %v1876
    %v1878 = vpop.f32.mrf.mxu0
    %v1879 = vadd.f32 %v1838, %v1878
    %v1880 = vpop.f32.mrf.mxu0
    %v1881 = vpop.f32.mrf.mxu0
    %1882 = vdwg.mxu0
    %1883 = vmatprep.subr.bf16.mxu0 0
    %1884 = vmatpush1.bf16.msra.mxu0 %v1226
    %1885 = vmatprep.subr.bf16.mxu0 0
    %1886 = vmatpush1.bf16.msra.mxu0 %v1219
    %1887 = vmatprep.subr.bf16.mxu0 0
    %1888 = vmatpush1.bf16.msra.mxu0 %v1212
    %1889 = vmatprep.subr.bf16.mxu0 0
    %1890 = vmatpush1.bf16.msra.mxu0 %v1205
    %1891 = vmatprep.subr.bf16.mxu0 0
    %1892 = vmatpush1.bf16.msra.mxu0 %v1198
    %1893 = vmatprep.subr.bf16.mxu0 0
    %1894 = vmatpush1.bf16.msra.mxu0 %v1191
    %1895 = vmatprep.subr.bf16.mxu0 0
    %1896 = vmatpush1.bf16.msra.mxu0 %v1184
    %1897 = vmatprep.subr.bf16.mxu0 0
    %1898 = vmatpush1.bf16.msra.mxu0 %v1177
    %1899 = vmatprep.subr.bf16.mxu0 0
    %1900 = vmatpush2.bf16.msra.mxu0 %v1282
    %1901 = vmatprep.subr.bf16.mxu0 0
    %1902 = vmatpush2.bf16.msra.mxu0 %v1275
    %1903 = vmatprep.subr.bf16.mxu0 0
    %1904 = vmatpush2.bf16.msra.mxu0 %v1268
    %1905 = vmatprep.subr.bf16.mxu0 0
    %1906 = vmatpush2.bf16.msra.mxu0 %v1261
    %1907 = vmatprep.subr.bf16.mxu0 0
    %1908 = vmatpush2.bf16.msra.mxu0 %v1254
    %1909 = vmatprep.subr.bf16.mxu0 0
    %1910 = vmatpush2.bf16.msra.mxu0 %v1247
    %1911 = vmatprep.subr.bf16.mxu0 0
    %1912 = vmatpush2.bf16.msra.mxu0 %v1240
    %1913 = vmatprep.subr.bf16.mxu0 0
    %1914 = vmatpush2.bf16.msra.mxu0 %v1233
    %1915 = vmatprep.mubr.bf16.mxu0 %v186
    %1916 = vmatmul.mubr.bf16.gmra.mxu0 %v185
    %v1917 = vpop.f32.mrf.mxu0
    %v1918 = vadd.f32 %v470, %v1917
    %v1919 = vpop.f32.mrf.mxu0
    %v1920 = vpop.f32.mrf.mxu0
    %v1921 = vpop.f32.mrf.mxu0
    %1922 = vdwg.mxu0
    %1923 = vmatprep.subr.bf16.mxu0 0
    %1924 = vmatpush1.bf16.msra.mxu0 %v1338
    %1925 = vmatprep.subr.bf16.mxu0 0
    %1926 = vmatpush1.bf16.msra.mxu0 %v1331
    %1927 = vmatprep.subr.bf16.mxu0 0
    %1928 = vmatpush1.bf16.msra.mxu0 %v1324
    %1929 = vmatprep.subr.bf16.mxu0 0
    %1930 = vmatpush1.bf16.msra.mxu0 %v1317
    %1931 = vmatprep.subr.bf16.mxu0 0
    %1932 = vmatpush1.bf16.msra.mxu0 %v1310
    %1933 = vmatprep.subr.bf16.mxu0 0
    %1934 = vmatpush1.bf16.msra.mxu0 %v1303
    %1935 = vmatprep.subr.bf16.mxu0 0
    %1936 = vmatpush1.bf16.msra.mxu0 %v1296
    %1937 = vmatprep.subr.bf16.mxu0 0
    %1938 = vmatpush1.bf16.msra.mxu0 %v1289
    %1939 = vmatprep.subr.bf16.mxu0 0
    %1940 = vmatpush2.bf16.msra.mxu0 %v1635
    %1941 = vmatprep.subr.bf16.mxu0 0
    %1942 = vmatpush2.bf16.msra.mxu0 %v1387
    %1943 = vmatprep.subr.bf16.mxu0 0
    %1944 = vmatpush2.bf16.msra.mxu0 %v1380
    %1945 = vmatprep.subr.bf16.mxu0 0
    %1946 = vmatpush2.bf16.msra.mxu0 %v1373
    %1947 = vmatprep.subr.bf16.mxu0 0
    %1948 = vmatpush2.bf16.msra.mxu0 %v1366
    %1949 = vmatprep.subr.bf16.mxu0 0
    %1950 = vmatpush2.bf16.msra.mxu0 %v1359
    %1951 = vmatprep.subr.bf16.mxu0 0
    %1952 = vmatpush2.bf16.msra.mxu0 %v1352
    %1953 = vmatprep.subr.bf16.mxu0 0
    %1954 = vmatpush2.bf16.msra.mxu0 %v1345
    %1955 = vmatprep.mubr.bf16.mxu0 %v1614
    %1956 = vmatmul.mubr.bf16.gmra.mxu0 %v187
    %v1957 = vpop.f32.mrf.mxu0
    %v1958 = vadd.f32 %v1918, %v1957
    %v1959 = vpop.f32.mrf.mxu0
    %v1960 = vpop.f32.mrf.mxu0
    %v1961 = vpop.f32.mrf.mxu0
    %1962 = vdwg.mxu0
    %v1963 = vxor.u32 %v1713, 2147483648
    %v1964 = vxor.u32 %v1715, 2147483648
    %v1965 = vxor.u32 %v1795, 2147483648
    %v1966 = vxor.u32 %v1797, 2147483648
    %v1967 = vxor.u32 %v1877, 2147483648
    %v1968 = vxor.u32 %v1879, 2147483648
    %v1969 = vxor.u32 %v1958, 2147483648
    %v1970 = vmul.f32 %v1963, 1.442695
    %v1971 = vpow.pop %v1970
    %v1972 = vmul.f32 %v1964, 1.442695
    %v1973 = vpow.pop %v1972
    %v1974 = vmul.f32 %v1965, 1.442695
    %v1975 = vpow.pop %v1974
    %v1976 = vmul.f32 %v1966, 1.442695
    %v1977 = vpow.pop %v1976
    %v1978 = vmul.f32 %v1967, 1.442695
    %v1979 = vpow.pop %v1978
    %v1980 = vmul.f32 %v1968, 1.442695
    %v1981 = vpow.pop %v1980
    %v1982 = vmul.f32 %v1969, 1.442695
    %v1983 = vpow.pop %v1982
    %v1984 = vadd.f32 %v1971, 1.0
    %v1985 = vadd.f32 %v1973, 1.0
    %v1986 = vadd.f32 %v1975, 1.0
    %v1987 = vadd.f32 %v1977, 1.0
    %v1988 = vadd.f32 %v1979, 1.0
    %v1989 = vadd.f32 %v1981, 1.0
    %v1990 = vadd.f32 %v1983, 1.0
    %v1991 = vrcp.pop %v1984
    %v1992 = vmul.f32 1.0, %v1991
    %v1993 = vrcp.pop %v1985
    %v1994 = vmul.f32 1.0, %v1993
    %v1995 = vrcp.pop %v1986
    %v1996 = vmul.f32 1.0, %v1995
    %v1997 = vrcp.pop %v1987
    %v1998 = vmul.f32 1.0, %v1997
    %v1999 = vrcp.pop %v1988
    %v2000 = vmul.f32 1.0, %v1999
    %v2001 = vrcp.pop %v1989
    %v2002 = vmul.f32 1.0, %v2001
    %v2003 = vrcp.pop %v1990
    %v2004 = vmul.f32 1.0, %v2003
    %2005 = vst [vmem:[#allocation2] sm:$0xff] %v1992
    %2006 = vst [vmem:[#allocation2 + $0x8] sm:$0xff] %v1994
    %2007 = vst [vmem:[#allocation2 + $0x10] sm:$0xff] %v1996
    %2008 = vst [vmem:[#allocation2 + $0x18] sm:$0xff] %v1998
    %2009 = vst [vmem:[#allocation2 + $0x20] sm:$0xff] %v2000
    %2010 = vst [vmem:[#allocation2 + $0x28] sm:$0xff] %v2002
    %vm2011 = vcmask 130048
    %2012 = vst.msk [vmem:[#allocation2 + $0x30] sm:$0xff] %vm2011, %v2004
    // Predicated region
    $region22: #{tpu_custom_call.1} parent=1 // pred_check
      _
    $region23: #{tpu_custom_call.1} parent=1 // pred_check_branch
      %2014 = sbr.rel (0) target = $region25
    $region24: #{tpu_custom_call.1} parent=1 // pred_region
      %s2016 = ssub.s32 896, 896
      %2017 = vsyncadd [#allocation3], %s2016
      %s2019 = sshll.u32 [#allocation2], 4
      %s2020 = int_to_ptr.vmem [resolvable:$true] %s2019
      %2022 = dma.vmem_to_hbm [thread:$0]  %s2020, 896, %s5, [#allocation3]
    $region25: #{tpu_custom_call.1} parent=1 // pred_fallthru
      _
    // Predicated region
    $region26: #{tpu_custom_call.1} parent=1 // pred_check
      _
    $region27: #{tpu_custom_call.1} parent=1 // pred_check_branch
      %2024 = sbr.rel (0) target = $region29
    $region28: #{tpu_custom_call.1} parent=1 // pred_region
      %2025 = dma.done [#allocation3], 896
    $region29: #{tpu_custom_call.1} parent=1 // pred_fallthru
      _
    %2026 = vsyncpa [#allocation3], 1

</llo_original>
